<compile_context>
chip_gen: v6e
topology: v6e:2x2x1
jax: 0.10.0
libtpu: 0.0.40
codegen_flags: <defaults>
</compile_context>

<pallas_src>
import math

import jax
import jax.numpy as jnp
from jax.experimental import pallas as pl
from jax.experimental.pallas import tpu as pltpu


def _vmem_limit_bytes():
    """~75% of physical VMEM (48 MiB on v7x, 96 MiB on v5e/v6e)."""
    cap = 64 * 1024 * 1024
    try:
        cap = int(pltpu.get_tpu_info().vmem_capacity_bytes)
    except Exception:
        pass
    return cap * 3 // 4


VMEM_LIMIT = _vmem_limit_bytes()
LN_EPS = 1e-12


def _gelu_tanh(x):
    # TODO(synk): HF BERT uses exact (erf) GELU; tanh approximation used here.
    return 0.5 * x * (1.0 + jnp.tanh(0.7978845608028654
                                     * (x + 0.044715 * x * x * x)))


def _layernorm(x, gamma, beta, eps=LN_EPS):
    mu = jnp.mean(x, axis=-1, keepdims=True)
    var = jnp.mean(jnp.square(x - mu), axis=-1, keepdims=True)
    return (x - mu) * jax.lax.rsqrt(var + eps) * gamma + beta


# ----------------------------------------------------------------------------
# Kernel 1: prologue = prompt_proj(prompt_embeddings)  +  embedding LayerNorm
# ----------------------------------------------------------------------------

def pallas_prologue(prompt_emb, proj_w, proj_b, emb_sum, ln_g, ln_b):
    """prompt_out = prompt_emb @ proj_w + proj_b ; emb_out = LN(emb_sum).

    prompt_emb: (T, H) f32, emb_sum: (M, H) f32.  Outputs are bf16.
    """
    T, H = prompt_emb.shape
    M, _ = emb_sum.shape

    def kernel(pe_ref, pw_ref, pb_ref, e_ref, g_ref, b_ref, po_ref, eo_ref):
        p = jnp.dot(pe_ref[...].astype(jnp.bfloat16), pw_ref[...],
                    preferred_element_type=jnp.float32) + pb_ref[...]
        po_ref[...] = p.astype(po_ref.dtype)
        x = e_ref[...].astype(jnp.float32)
        eo_ref[...] = _layernorm(x, g_ref[...], b_ref[...]).astype(eo_ref.dtype)

    return pl.pallas_call(
        kernel,
        out_shape=(jax.ShapeDtypeStruct((T, H), jnp.bfloat16),
                   jax.ShapeDtypeStruct((M, H), jnp.bfloat16)),
        grid_spec=pltpu.PrefetchScalarGridSpec(
            num_scalar_prefetch=0,
            grid=(1,),
            in_specs=[pl.BlockSpec((T, H), lambda i: (0, 0)),
                      pl.BlockSpec((H, H), lambda i: (0, 0)),
                      pl.BlockSpec((1, H), lambda i: (0, 0)),
                      pl.BlockSpec((M, H), lambda i: (0, 0)),
                      pl.BlockSpec((1, H), lambda i: (0, 0)),
                      pl.BlockSpec((1, H), lambda i: (0, 0))],
            out_specs=(pl.BlockSpec((T, H), lambda i: (0, 0)),
                       pl.BlockSpec((M, H), lambda i: (0, 0))),
        ),
        compiler_params=pltpu.CompilerParams(
            dimension_semantics=("arbitrary",),
            vmem_limit_bytes=VMEM_LIMIT),
    )(prompt_emb, proj_w, proj_b.reshape(1, -1), emb_sum,
      ln_g.reshape(1, -1), ln_b.reshape(1, -1))


# ----------------------------------------------------------------------------
# Kernel 2: one full BERT encoder layer (QKV -> attention -> o/LN -> FFN/LN)
# ----------------------------------------------------------------------------

def pallas_encoder_layer(x, add_mask, lyr, num_heads, head_dim):
    """x: (B, S, H) bf16, add_mask: (B, 1, S) f32 additive mask -> (B, S, H) bf16.

    Fused QKV weight columns are laid out [Q | K | V], heads head-major inside
    each section (weights are initialized in this layout below).
    """
    B, S, H = x.shape
    I = lyr["i_w"].shape[1]
    Dh = head_dim
    scale = 1.0 / math.sqrt(Dh)

    def kernel(x_ref, m_ref, wqkv_ref, bqkv_ref, wo_ref, bo_ref, g1_ref, bt1_ref,
               wi_ref, bi_ref, wf_ref, bf_ref, g2_ref, bt2_ref, o_ref):
        xv = x_ref[0]                                   # (S, H) bf16
        mask = m_ref[0]                                 # (1, S) f32

        # --- fused QKV projection (bf16 MXU, f32 accumulate) -----------------
        qkv = jnp.dot(xv, wqkv_ref[...], preferred_element_type=jnp.float32)
        qkv = (qkv + bqkv_ref[...]).astype(jnp.bfloat16)         # (S, 3H)
        q = qkv[:, :H]
        k = qkv[:, H:2 * H]
        v = qkv[:, 2 * H:]

        # --- multi-head attention; single lane-dense (S, H) context ---------
        ctx_heads = []
        for h in range(num_heads):
            lo = h * Dh
            qh = q[:, lo:lo + Dh]                       # value slices (no ref
            kh = k[:, lo:lo + Dh]                       #  sub-block DMAs)
            vh = v[:, lo:lo + Dh]
            s = jax.lax.dot_general(qh, kh, (((1,), (1,)), ((), ())),
                                    preferred_element_type=jnp.float32)  # (S,S)
            s = s * scale + mask
            s = s - jnp.max(s, axis=-1, keepdims=True)
            p = jnp.exp(s)
            p = p * pl.reciprocal(jnp.sum(p, axis=-1, keepdims=True), approx=True)
            ctx_heads.append(jnp.dot(p.astype(jnp.bfloat16), vh,
                                     preferred_element_type=jnp.float32))
        ctx = jnp.concatenate(ctx_heads, axis=-1).astype(jnp.bfloat16)   # (S, H)

        # --- o-projection + residual + LayerNorm (f32 stats) ----------------
        h1 = jnp.dot(ctx, wo_ref[...], preferred_element_type=jnp.float32)
        h1 = h1 + bo_ref[...] + xv.astype(jnp.float32)
        h1 = _layernorm(h1, g1_ref[...], bt1_ref[...])
        h1b = h1.astype(jnp.bfloat16)

        # --- FFN up + GELU ----------------------------------------------------
        u = jnp.dot(h1b, wi_ref[...], preferred_element_type=jnp.float32)
        u = _gelu_tanh(u + bi_ref[...]).astype(jnp.bfloat16)             # (S, I)

        # --- FFN down + residual + LayerNorm ----------------------------------
        h2 = jnp.dot(u, wf_ref[...], preferred_element_type=jnp.float32)
        h2 = h2 + bf_ref[...] + h1
        h2 = _layernorm(h2, g2_ref[...], bt2_ref[...])
        o_ref[0] = h2.astype(o_ref.dtype)

    def full(r, c):
        return pl.BlockSpec((r, c), lambda b: (0, 0))

    return pl.pallas_call(
        kernel,
        out_shape=jax.ShapeDtypeStruct((B, S, H), jnp.bfloat16),
        grid_spec=pltpu.PrefetchScalarGridSpec(
            num_scalar_prefetch=0,
            grid=(B,),
            in_specs=[
                pl.BlockSpec((1, S, H), lambda b: (b, 0, 0)),      # x
                pl.BlockSpec((1, 1, S), lambda b: (b, 0, 0)),      # additive mask
                full(H, 3 * H), full(1, 3 * H),                    # W_qkv, b_qkv
                full(H, H), full(1, H),                            # W_o, b_o
                full(1, H), full(1, H),                            # LN1 gamma/beta
                full(H, I), full(1, I),                            # W_i, b_i
                full(I, H), full(1, H),                            # W_f, b_f
                full(1, H), full(1, H),                            # LN2 gamma/beta
            ],
            out_specs=pl.BlockSpec((1, S, H), lambda b: (b, 0, 0)),
        ),
        compiler_params=pltpu.CompilerParams(
            dimension_semantics=("parallel",),
            vmem_limit_bytes=VMEM_LIMIT),
    )(x, add_mask,
      lyr["qkv_w"], lyr["qkv_b"].reshape(1, -1),
      lyr["o_w"], lyr["o_b"].reshape(1, -1),
      lyr["ln1_g"].reshape(1, -1), lyr["ln1_b"].reshape(1, -1),
      lyr["i_w"], lyr["i_b"].reshape(1, -1),
      lyr["f_w"], lyr["f_b"].reshape(1, -1),
      lyr["ln2_g"].reshape(1, -1), lyr["ln2_b"].reshape(1, -1))


# ----------------------------------------------------------------------------
# Kernel 3: pooler (first token, linear + tanh) + classifier, fused
# ----------------------------------------------------------------------------

def pallas_pooler_classifier(cls_tok, pool_w, pool_b, cls_w, cls_b):
    """logits = tanh(cls_tok @ pool_w + pool_b) @ cls_w + cls_b  (f32 output)."""
    B, H = cls_tok.shape
    L = cls_w.shape[1]

    def kernel(x_ref, pw_ref, pb_ref, cw_ref, cb_ref, o_ref):
        pooled = jnp.tanh(jnp.dot(x_ref[...].astype(jnp.bfloat16), pw_ref[...],
                                  preferred_element_type=jnp.float32) + pb_ref[...])
        logits = jnp.dot(pooled.astype(jnp.bfloat16), cw_ref[...],
                         preferred_element_type=jnp.float32) + cb_ref[...]
        o_ref[...] = logits.astype(o_ref.dtype)

    return pl.pallas_call(
        kernel,
        out_shape=jax.ShapeDtypeStruct((B, L), jnp.float32),
        grid_spec=pltpu.PrefetchScalarGridSpec(
            num_scalar_prefetch=0,
            grid=(1,),
            in_specs=[pl.BlockSpec((B, H), lambda i: (0, 0)),
                      pl.BlockSpec((H, H), lambda i: (0, 0)),
                      pl.BlockSpec((1, H), lambda i: (0, 0)),
                      pl.BlockSpec((H, L), lambda i: (0, 0)),
                      pl.BlockSpec((1, L), lambda i: (0, 0))],
            out_specs=pl.BlockSpec((B, L), lambda i: (0, 0)),
        ),
        compiler_params=pltpu.CompilerParams(
            dimension_semantics=("arbitrary",),
            vmem_limit_bytes=VMEM_LIMIT),
    )(cls_tok, pool_w, pool_b.reshape(1, -1), cls_w, cls_b.reshape(1, -1))


# ----------------------------------------------------------------------------
# Model: PromptBERT (prompt tuning on a small synthetic BERT)
# ----------------------------------------------------------------------------

CONFIG = dict(
    hidden=768,           # fixed by prompt_embeddings / prompt_proj in the module
    num_heads=12,
    head_dim=64,
    intermediate=3072,
    num_layers=2,
    vocab=100,
    max_pos=512,
    type_vocab=2,
    num_labels=2,
    num_tokens=8,         # small stand-in for num_tokens=50
)


def init_params(key, cfg):
    H, I = cfg["hidden"], cfg["intermediate"]
    keys = iter(jax.random.split(key, 128))
    nk = lambda: next(keys)
    # matmul weights stored in bf16 (MXU operands); biases / LN params in f32
    dense_w = lambda fi, fo: (jax.random.normal(nk(), (fi, fo), jnp.float32)
                              * 0.02).astype(jnp.bfloat16)
    dense_b = lambda fo: jnp.zeros((fo,), jnp.float32)

    params = dict(
        word_emb=jax.random.normal(nk(), (cfg["vocab"], H), jnp.float32) * 0.02,
        pos_emb=jax.random.normal(nk(), (cfg["max_pos"], H), jnp.float32) * 0.02,
        type_emb=jax.random.normal(nk(), (cfg["type_vocab"], H), jnp.float32) * 0.02,
        emb_ln_g=jnp.ones((H,), jnp.float32),
        emb_ln_b=jnp.zeros((H,), jnp.float32),
        # module __init__ uses torch.zeros; random here to exercise the kernels
        prompt_emb=jax.random.normal(nk(), (cfg["num_tokens"], H), jnp.float32) * 0.02,
        proj_w=dense_w(H, H), proj_b=dense_b(H),
        pool_w=dense_w(H, H), pool_b=dense_b(H),
        cls_w=dense_w(H, cfg["num_labels"]), cls_b=dense_b(cfg["num_labels"]),
        layers=[],
    )
    for _ in range(cfg["num_layers"]):
        params["layers"].append(dict(
            qkv_w=dense_w(H, 3 * H), qkv_b=dense_b(3 * H),   # fused [Q|K|V] projection
            o_w=dense_w(H, H), o_b=dense_b(H),
            ln1_g=jnp.ones((H,), jnp.float32), ln1_b=jnp.zeros((H,), jnp.float32),
            i_w=dense_w(H, I), i_b=dense_b(I),
            f_w=dense_w(I, H), f_b=dense_b(H),
            ln2_g=jnp.ones((H,), jnp.float32), ln2_b=jnp.zeros((H,), jnp.float32),
        ))
    return params


def prompt_bert_forward(params, input_ids, attention_mask, labels=None, cfg=CONFIG):
    B, S_in = input_ids.shape
    H = cfg["hidden"]
    num_tokens = cfg["num_tokens"]

    # ---- bert.bert.embeddings(x): gathers are glue; LayerNorm runs in Pallas
    we = params["word_emb"][input_ids]                      # (B, S_in, H)
    pe = params["pos_emb"][:S_in][None, :, :]               # (1, S_in, H)
    te = params["type_emb"][0][None, None, :]               # (1, 1, H)
    emb_sum = (we + pe + te).reshape(B * S_in, H)

    # ---- fused prologue: prompt_proj(prompt_embeddings) + embedding LayerNorm
    prompt, emb = pallas_prologue(params["prompt_emb"], params["proj_w"],
                                  params["proj_b"], emb_sum,
                                  params["emb_ln_g"], params["emb_ln_b"])
    emb = emb.reshape(B, S_in, H)

    # ---- incorporate_prompt: prepend projected prompt after [CLS] (dropout p=0)
    prompt = jnp.broadcast_to(prompt[None, :, :], (B, num_tokens, H))
    x = jnp.concatenate([emb[:, :1, :], prompt, emb[:, 1:, :]], axis=1)[:, :512, :]

    am = jnp.concatenate(
        [jnp.ones((B, num_tokens), attention_mask.dtype), attention_mask],
        axis=1)[:, :512]
    add_mask = ((1.0 - am.astype(jnp.float32)) * -1e9)[:, None, :]   # (B, 1, S)

    B, S, _ = x.shape
    hidden_states = [x]

    # ---- bert.bert.encoder: one fused pallas_call per layer
    for lyr in params["layers"]:
        x = pallas_encoder_layer(x, add_mask, lyr, cfg["num_heads"], cfg["head_dim"])
        hidden_states.append(x)

    # ---- pooler (first token) + classifier fused (dropout p=0.0 -> identity)
    logits = pallas_pooler_classifier(x[:, 0, :], params["pool_w"], params["pool_b"],
                                      params["cls_w"], params["cls_b"])

    loss = None
    if labels is not None:
        logp = jax.nn.log_softmax(logits.astype(jnp.float32), axis=-1)
        loss = -jnp.mean(jnp.take_along_axis(logp, labels[:, None], axis=1))

    return {"loss": loss, "logits": logits, "hidden_states": tuple(hidden_states)}


# ----------------------------------------------------------------------------

if __name__ == "__main__":
    key = jax.random.PRNGKey(0)
    k_param, k_ids, k_lbl = jax.random.split(key, 3)

    params = init_params(k_param, CONFIG)

    B, S_in = 2, 8
    input_ids = jax.random.randint(k_ids, (B, S_in), 0, CONFIG["vocab"], dtype=jnp.int32)
    attention_mask = jnp.ones((B, S_in), jnp.int32)
    labels = jax.random.randint(k_lbl, (B,), 0, CONFIG["num_labels"], dtype=jnp.int32)

    out = prompt_bert_forward(params, input_ids, attention_mask, labels=labels)
    jax.block_until_ready(out["logits"])
    jax.block_until_ready(out["loss"])
    jax.block_until_ready(out["hidden_states"])
    print("KERNEL_OK")
</pallas_src>

<mosaic_0001>
module attributes {stable_mosaic.version = 11 : i64} {
  func.func @kernel(%arg0: i32, %arg1: memref<8x768xf32, #tpu.memory_space<vmem>>, %arg2: memref<768x768xbf16, #tpu.memory_space<vmem>>, %arg3: memref<1x768xf32, #tpu.memory_space<vmem>>, %arg4: memref<16x768xf32, #tpu.memory_space<vmem>>, %arg5: memref<1x768xf32, #tpu.memory_space<vmem>>, %arg6: memref<1x768xf32, #tpu.memory_space<vmem>>, %arg7: memref<8x768xbf16, #tpu.memory_space<vmem>>, %arg8: memref<16x768xbf16, #tpu.memory_space<vmem>>) attributes {dimension_semantics = [#tpu.dimension_semantics<arbitrary>], iteration_bounds = array<i64: 1>, scalar_prefetch = 0 : i64, scratch_operands = 0 : i64, tpu.core_type = #tpu.core_type<tc>, window_params = [{pipeline_mode = #tpu.pipeline_mode<synchronous>, transform_indices = @transform_0, window_bounds = array<i64: 8, 768>}, {pipeline_mode = #tpu.pipeline_mode<synchronous>, transform_indices = @transform_1, window_bounds = array<i64: 768, 768>}, {pipeline_mode = #tpu.pipeline_mode<synchronous>, transform_indices = @transform_2, window_bounds = array<i64: 1, 768>}, {pipeline_mode = #tpu.pipeline_mode<synchronous>, transform_indices = @transform_3, window_bounds = array<i64: 16, 768>}, {pipeline_mode = #tpu.pipeline_mode<synchronous>, transform_indices = @transform_4, window_bounds = array<i64: 1, 768>}, {pipeline_mode = #tpu.pipeline_mode<synchronous>, transform_indices = @transform_5, window_bounds = array<i64: 1, 768>}, {pipeline_mode = #tpu.pipeline_mode<synchronous>, transform_indices = @transform_6, window_bounds = array<i64: 8, 768>}, {pipeline_mode = #tpu.pipeline_mode<synchronous>, transform_indices = @transform_7, window_bounds = array<i64: 16, 768>}]} {
    %c0 = arith.constant 0 : index
    %c0_0 = arith.constant 0 : index
    %0 = vector.load %arg1[%c0, %c0_0] : memref<8x768xf32, #tpu.memory_space<vmem>>, vector<8x768xf32>
    %1 = arith.truncf %0 : vector<8x768xf32> to vector<8x768xbf16>
    %c0_1 = arith.constant 0 : index
    %c0_2 = arith.constant 0 : index
    %2 = vector.load %arg2[%c0_1, %c0_2] : memref<768x768xbf16, #tpu.memory_space<vmem>>, vector<768x768xbf16>
    %cst = arith.constant dense<0.000000e+00> : vector<8x768xf32>
    %3 = tpu.matmul %1, %2, %cst {dimension_numbers = #tpu.dot_dimension_numbers<[1], [0], [0], [1], [0, 0, 1, 1], [], []>} : vector<8x768xbf16>, vector<768x768xbf16>, vector<8x768xf32> -> vector<8x768xf32>
    %c0_3 = arith.constant 0 : index
    %c0_4 = arith.constant 0 : index
    %4 = vector.load %arg3[%c0_3, %c0_4] : memref<1x768xf32, #tpu.memory_space<vmem>>, vector<1x768xf32>
    %5 = vector.broadcast %4 : vector<1x768xf32> to vector<8x768xf32>
    %6 = arith.addf %3, %5 : vector<8x768xf32>
    %7 = arith.truncf %6 : vector<8x768xf32> to vector<8x768xbf16>
    %c0_5 = arith.constant 0 : index
    %c0_6 = arith.constant 0 : index
    %8 = vector.load %arg7[%c0_5, %c0_6] : memref<8x768xbf16, #tpu.memory_space<vmem>>, vector<8x768xbf16>
    tpu.vector_store %arg7[%c0_5, %c0_6], %7 {strides = array<i32>} : memref<8x768xbf16, #tpu.memory_space<vmem>>, vector<8x768xbf16>,
    %c0_7 = arith.constant 0 : index
    %c0_8 = arith.constant 0 : index
    %9 = vector.load %arg4[%c0_7, %c0_8] : memref<16x768xf32, #tpu.memory_space<vmem>>, vector<16x768xf32>
    %c0_9 = arith.constant 0 : index
    %c0_10 = arith.constant 0 : index
    %10 = vector.load %arg5[%c0_9, %c0_10] : memref<1x768xf32, #tpu.memory_space<vmem>>, vector<1x768xf32>
    %c0_11 = arith.constant 0 : index
    %c0_12 = arith.constant 0 : index
    %11 = vector.load %arg6[%c0_11, %c0_12] : memref<1x768xf32, #tpu.memory_space<vmem>>, vector<1x768xf32>
    %cst_13 = arith.constant dense<0.000000e+00> : vector<16xf32>
    %12 = vector.multi_reduction <add>, %9, %cst_13 [1] : vector<16x768xf32> to vector<16xf32>
    %13 = vector.shape_cast %12 : vector<16xf32> to vector<16x1xf32>
    %cst_14 = arith.constant 7.680000e+02 : f32
    %14 = vector.broadcast %cst_14 : f32 to vector<16x1xf32>
    %15 = arith.divf %13, %14 : vector<16x1xf32>
    %16 = vector.broadcast %15 : vector<16x1xf32> to vector<16x768xf32>
    %17 = arith.subf %9, %16 : vector<16x768xf32>
    %18 = arith.mulf %17, %17 : vector<16x768xf32>
    %cst_15 = arith.constant dense<0.000000e+00> : vector<16xf32>
    %19 = vector.multi_reduction <add>, %18, %cst_15 [1] : vector<16x768xf32> to vector<16xf32>
    %20 = vector.shape_cast %19 : vector<16xf32> to vector<16x1xf32>
    %cst_16 = arith.constant 7.680000e+02 : f32
    %21 = vector.broadcast %cst_16 : f32 to vector<16x1xf32>
    %22 = arith.divf %20, %21 : vector<16x1xf32>
    %23 = vector.broadcast %15 : vector<16x1xf32> to vector<16x768xf32>
    %24 = arith.subf %9, %23 : vector<16x768xf32>
    %cst_17 = arith.constant 9.99999996E-13 : f32
    %25 = vector.broadcast %cst_17 : f32 to vector<16x1xf32>
    %26 = arith.addf %22, %25 : vector<16x1xf32>
    %27 = math.rsqrt %26 : vector<16x1xf32>
    %28 = vector.broadcast %27 : vector<16x1xf32> to vector<16x768xf32>
    %29 = arith.mulf %24, %28 : vector<16x768xf32>
    %30 = vector.broadcast %10 : vector<1x768xf32> to vector<16x768xf32>
    %31 = arith.mulf %29, %30 : vector<16x768xf32>
    %32 = vector.broadcast %11 : vector<1x768xf32> to vector<16x768xf32>
    %33 = arith.addf %31, %32 : vector<16x768xf32>
    %34 = arith.truncf %33 : vector<16x768xf32> to vector<16x768xbf16>
    %c0_18 = arith.constant 0 : index
    %c0_19 = arith.constant 0 : index
    %35 = vector.load %arg8[%c0_18, %c0_19] : memref<16x768xbf16, #tpu.memory_space<vmem>>, vector<16x768xbf16>
    tpu.vector_store %arg8[%c0_18, %c0_19], %34 {strides = array<i32>} : memref<16x768xbf16, #tpu.memory_space<vmem>>, vector<16x768xbf16>,
    return
  }
  func.func @transform_0(%arg0: i32) -> (i32, i32) {
    %c0_i32 = arith.constant 0 : i32
    %c0_i32_0 = arith.constant 0 : i32
    %c0_i32_1 = arith.constant 0 : i32
    return %c0_i32, %c0_i32_0 : i32, i32
  }
  func.func @transform_1(%arg0: i32) -> (i32, i32) {
    %c0_i32 = arith.constant 0 : i32
    %c0_i32_0 = arith.constant 0 : i32
    %c0_i32_1 = arith.constant 0 : i32
    return %c0_i32, %c0_i32_0 : i32, i32
  }
  func.func @transform_2(%arg0: i32) -> (i32, i32) {
    %c0_i32 = arith.constant 0 : i32
    %c0_i32_0 = arith.constant 0 : i32
    %c0_i32_1 = arith.constant 0 : i32
    return %c0_i32, %c0_i32_0 : i32, i32
  }
  func.func @transform_3(%arg0: i32) -> (i32, i32) {
    %c0_i32 = arith.constant 0 : i32
    %c0_i32_0 = arith.constant 0 : i32
    %c0_i32_1 = arith.constant 0 : i32
    return %c0_i32, %c0_i32_0 : i32, i32
  }
  func.func @transform_4(%arg0: i32) -> (i32, i32) {
    %c0_i32 = arith.constant 0 : i32
    %c0_i32_0 = arith.constant 0 : i32
    %c0_i32_1 = arith.constant 0 : i32
    return %c0_i32, %c0_i32_0 : i32, i32
  }
  func.func @transform_5(%arg0: i32) -> (i32, i32) {
    %c0_i32 = arith.constant 0 : i32
    %c0_i32_0 = arith.constant 0 : i32
    %c0_i32_1 = arith.constant 0 : i32
    return %c0_i32, %c0_i32_0 : i32, i32
  }
  func.func @transform_6(%arg0: i32) -> (i32, i32) {
    %c0_i32 = arith.constant 0 : i32
    %c0_i32_0 = arith.constant 0 : i32
    %c0_i32_1 = arith.constant 0 : i32
    return %c0_i32, %c0_i32_0 : i32, i32
  }
  func.func @transform_7(%arg0: i32) -> (i32, i32) {
    %c0_i32 = arith.constant 0 : i32
    %c0_i32_0 = arith.constant 0 : i32
    %c0_i32_1 = arith.constant 0 : i32
    return %c0_i32, %c0_i32_0 : i32, i32
  }
}

</mosaic_0001>

<llo_original>
// kernel: tpu_custom_call.1
$region0: #{tpu_custom_call.1}
  #allocation0 [shape = 'u32[]', space=smem, size = 0x4, offset = 0x4, fixed_abs, tag = 'smem constant byte address 0x4 - core index']
  #allocation1 [shape = 'u32[144,128]{1,0:T(1,128)}', space=vmem, size = 0x12000, scoped, tag = 'internal scratch']
  %s0 = inlined_call_operand.hbm [shape: f32[8,768], index: 0, kind: input, shape index: {}]
  %s1 = inlined_call_operand.hbm [shape: bf16[768,768], index: 1, kind: input, shape index: {}]
  %s2 = inlined_call_operand.hbm [shape: f32[1,768], index: 2, kind: input, shape index: {}]
  %s3 = inlined_call_operand.hbm [shape: f32[16,768], index: 3, kind: input, shape index: {}]
  %s4 = inlined_call_operand.hbm [shape: f32[1,768], index: 4, kind: input, shape index: {}]
  %s5 = inlined_call_operand.hbm [shape: f32[1,768], index: 5, kind: input, shape index: {}]
  %s6 = inlined_call_operand.hbm [shape: bf16[8,768], index: 6, kind: output, shape index: {0}]
  %s7 = inlined_call_operand.hbm [shape: bf16[16,768], index: 7, kind: output, shape index: {1}]
  %8 = xla_tuple %s6, %s7
  %s9 = sld [smem:[#allocation0]]
  $region66: #{tpu_custom_call.1} parent=0
    _
  %s11 = ssub.s32 1, %s9
  %s12 = scalar_select 0, %s11, %s9
  $region1: #{tpu_custom_call.1} parent=0
    #allocation2 [shape = 'u8[24576]{0}', space=vmem, size = 0x6000, scoped, tag = 'input window, operand 0, single buffered']
    #allocation3 [shape = 's32[1]{0}', space=sflag, size = 0x4, scoped, tag = 'scoped memory for tpu_custom_call.1']
    #allocation4 [shape = 's32[1]{0}', space=sflag, size = 0x4, scoped, tag = 'scoped memory for tpu_custom_call.1']
    #allocation5 [shape = 'u8[1179648]{0}', space=vmem, size = 0x120000, scoped, tag = 'input window, operand 1, single buffered']
    #allocation6 [shape = 's32[1]{0}', space=sflag, size = 0x4, scoped, tag = 'scoped memory for tpu_custom_call.1']
    #allocation7 [shape = 'u8[3072]{0}', space=vmem, size = 0xc00, scoped, tag = 'input window, operand 2, single buffered']
    #allocation8 [shape = 'u8[49152]{0}', space=vmem, size = 0xc000, scoped, tag = 'input window, operand 3, single buffered']
    #allocation9 [shape = 's32[1]{0}', space=sflag, size = 0x4, scoped, tag = 'scoped memory for tpu_custom_call.1']
    #allocation10 [shape = 'u8[3072]{0}', space=vmem, size = 0xc00, scoped, tag = 'input window, operand 4, single buffered']
    #allocation11 [shape = 'u8[3072]{0}', space=vmem, size = 0xc00, scoped, tag = 'input window, operand 5, single buffered']
    #allocation12 [shape = 's32[1]{0}', space=sflag, size = 0x4, scoped, tag = 'scoped memory for tpu_custom_call.1']
    #allocation13 [shape = 'u8[12288]{0}', space=vmem, size = 0x3000, scoped, tag = 'output window, operand 0, single buffered']
    #allocation14 [shape = 'u8[24576]{0}', space=vmem, size = 0x6000, scoped, tag = 'output window, operand 1, single buffered']
    #allocation15 [shape = 's32[1]{0}', space=sflag, size = 0x4, scoped, tag = 'scoped memory for tpu_custom_call.1']
    %13 = vsyncpa [#allocation3], 0
    %14 = vsyncpa [#allocation6], 0
    %15 = vsyncpa [#allocation9], 0
    %16 = vsyncpa [#allocation12], 0
    %17 = vsyncpa [#allocation4], 0
    %18 = vsyncpa [#allocation15], 0
    // Predicated region
    $region2: #{tpu_custom_call.1} parent=1 // pred_check
      _
    $region3: #{tpu_custom_call.1} parent=1 // pred_check_branch
      %20 = sbr.rel (0) target = $region5
    $region4: #{tpu_custom_call.1} parent=1 // pred_region
      %s22 = ssub.s32 768, 768
      %23 = vsyncadd [#allocation3], %s22
      %s25 = sshll.u32 [#allocation2], 4
      %s26 = int_to_ptr.vmem [resolvable:$true] %s25
      %28 = dma.hbm_to_vmem [thread:$0]  %s0, 768, %s26, [#allocation3]
    $region5: #{tpu_custom_call.1} parent=1 // pred_fallthru
      _
    // Predicated region
    $region6: #{tpu_custom_call.1} parent=1 // pred_check
      _
    $region7: #{tpu_custom_call.1} parent=1 // pred_check_branch
      %30 = sbr.rel (0) target = $region9
    $region8: #{tpu_custom_call.1} parent=1 // pred_region
      %s32 = ssub.s32 36864, 36864
      %33 = vsyncadd [#allocation6], %s32
      %s34 = sshll.u32 [#allocation5], 4
      %s35 = int_to_ptr.vmem [resolvable:$true] %s34
      %40 = dma.hbm_to_vmem [thread:$0]  %s1, 36864, %s35, [#allocation6], 384, 384, 24
    $region9: #{tpu_custom_call.1} parent=1 // pred_fallthru
      _
    // Predicated region
    $region10: #{tpu_custom_call.1} parent=1 // pred_check
      _
    $region11: #{tpu_custom_call.1} parent=1 // pred_check_branch
      %42 = sbr.rel (0) target = $region13
    $region12: #{tpu_custom_call.1} parent=1 // pred_region
      %s44 = ssub.s32 96, 96
      %45 = vsyncadd [#allocation6], %s44
      %s47 = sshll.u32 [#allocation7], 4
      %s48 = int_to_ptr.vmem [resolvable:$true] %s47
      %50 = dma.hbm_to_vmem [thread:$0]  %s2, 96, %s48, [#allocation6]
    $region13: #{tpu_custom_call.1} parent=1 // pred_fallthru
      _
    // Predicated region
    $region14: #{tpu_custom_call.1} parent=1 // pred_check
      _
    $region15: #{tpu_custom_call.1} parent=1 // pred_check_branch
      %52 = sbr.rel (0) target = $region17
    $region16: #{tpu_custom_call.1} parent=1 // pred_region
      %s54 = ssub.s32 1536, 1536
      %55 = vsyncadd [#allocation9], %s54
      %s56 = sshll.u32 [#allocation8], 4
      %s57 = int_to_ptr.vmem [resolvable:$true] %s56
      %62 = dma.hbm_to_vmem [thread:$0]  %s3, 1536, %s57, [#allocation9], 768, 768, 48
    $region17: #{tpu_custom_call.1} parent=1 // pred_fallthru
      _
    // Predicated region
    $region18: #{tpu_custom_call.1} parent=1 // pred_check
      _
    $region19: #{tpu_custom_call.1} parent=1 // pred_check_branch
      %64 = sbr.rel (0) target = $region21
    $region20: #{tpu_custom_call.1} parent=1 // pred_region
      %s66 = ssub.s32 96, 96
      %67 = vsyncadd [#allocation9], %s66
      %s69 = sshll.u32 [#allocation10], 4
      %s70 = int_to_ptr.vmem [resolvable:$true] %s69
      %72 = dma.hbm_to_vmem [thread:$0]  %s4, 96, %s70, [#allocation9]
    $region21: #{tpu_custom_call.1} parent=1 // pred_fallthru
      _
    // Predicated region
    $region22: #{tpu_custom_call.1} parent=1 // pred_check
      _
    $region23: #{tpu_custom_call.1} parent=1 // pred_check_branch
      %74 = sbr.rel (0) target = $region25
    $region24: #{tpu_custom_call.1} parent=1 // pred_region
      %s76 = ssub.s32 96, 96
      %77 = vsyncadd [#allocation12], %s76
      %s79 = sshll.u32 [#allocation11], 4
      %s80 = int_to_ptr.vmem [resolvable:$true] %s79
      %82 = dma.hbm_to_vmem [thread:$0]  %s5, 96, %s80, [#allocation12]
    $region25: #{tpu_custom_call.1} parent=1 // pred_fallthru
      _
    // Predicated region
    $region26: #{tpu_custom_call.1} parent=1 // pred_check
      _
    $region27: #{tpu_custom_call.1} parent=1 // pred_check_branch
      %84 = sbr.rel (0) target = $region29
    $region28: #{tpu_custom_call.1} parent=1 // pred_region
      %85 = dma.done [#allocation3], 768
    $region29: #{tpu_custom_call.1} parent=1 // pred_fallthru
      _
    // Predicated region
    $region30: #{tpu_custom_call.1} parent=1 // pred_check
      _
    $region31: #{tpu_custom_call.1} parent=1 // pred_check_branch
      %87 = sbr.rel (0) target = $region33
    $region32: #{tpu_custom_call.1} parent=1 // pred_region
      %88 = dma.done [#allocation6], 36864
    $region33: #{tpu_custom_call.1} parent=1 // pred_fallthru
      _
    // Predicated region
    $region34: #{tpu_custom_call.1} parent=1 // pred_check
      _
    $region35: #{tpu_custom_call.1} parent=1 // pred_check_branch
      %90 = sbr.rel (0) target = $region37
    $region36: #{tpu_custom_call.1} parent=1 // pred_region
      %91 = dma.done [#allocation6], 96
    $region37: #{tpu_custom_call.1} parent=1 // pred_fallthru
      _
    // Predicated region
    $region38: #{tpu_custom_call.1} parent=1 // pred_check
      _
    $region39: #{tpu_custom_call.1} parent=1 // pred_check_branch
      %93 = sbr.rel (0) target = $region41
    $region40: #{tpu_custom_call.1} parent=1 // pred_region
      %94 = dma.done [#allocation9], 1536
    $region41: #{tpu_custom_call.1} parent=1 // pred_fallthru
      _
    // Predicated region
    $region42: #{tpu_custom_call.1} parent=1 // pred_check
      _
    $region43: #{tpu_custom_call.1} parent=1 // pred_check_branch
      %96 = sbr.rel (0) target = $region45
    $region44: #{tpu_custom_call.1} parent=1 // pred_region
      %97 = dma.done [#allocation9], 96
    $region45: #{tpu_custom_call.1} parent=1 // pred_fallthru
      _
    // Predicated region
    $region46: #{tpu_custom_call.1} parent=1 // pred_check
      _
    $region47: #{tpu_custom_call.1} parent=1 // pred_check_branch
      %99 = sbr.rel (0) target = $region49
    $region48: #{tpu_custom_call.1} parent=1 // pred_region
      %100 = dma.done [#allocation12], 96
    $region49: #{tpu_custom_call.1} parent=1 // pred_fallthru
      _
    %v101 = vld [vmem:[#allocation2] sm:$0xff]
    %v102 = vld [vmem:[#allocation2 + $0x8] sm:$0xff]
    %v103 = vld [vmem:[#allocation2 + $0x10] sm:$0xff]
    %v104 = vld [vmem:[#allocation2 + $0x18] sm:$0xff]
    %v105 = vld [vmem:[#allocation2 + $0x20] sm:$0xff]
    %v106 = vld [vmem:[#allocation2 + $0x28] sm:$0xff]
    %v107 = vpack.c.bf16 %v101, %v101
    %v108 = vpack.c.bf16 %v102, %v102
    %v109 = vpack.c.bf16 %v103, %v103
    %v110 = vpack.c.bf16 %v104, %v104
    %v111 = vpack.c.bf16 %v105, %v105
    %v112 = vpack.c.bf16 %v106, %v106
    %v113 = vld [vmem:[#allocation5] sm:$0xff]
    %v114 = vld [vmem:[#allocation5 + $0x8] sm:$0xff]
    %v115 = vld [vmem:[#allocation5 + $0x10] sm:$0xff]
    %v116 = vld [vmem:[#allocation5 + $0x18] sm:$0xff]
    %v117 = vld [vmem:[#allocation5 + $0x20] sm:$0xff]
    %v118 = vld [vmem:[#allocation5 + $0x28] sm:$0xff]
    %v119 = vld [vmem:[#allocation5 + $0x30] sm:$0xff]
    %v120 = vld [vmem:[#allocation5 + $0x38] sm:$0xff]
    %v121 = vld [vmem:[#allocation5 + $0x40] sm:$0xff]
    %v122 = vld [vmem:[#allocation5 + $0x48] sm:$0xff]
    %v123 = vld [vmem:[#allocation5 + $0x50] sm:$0xff]
    %v124 = vld [vmem:[#allocation5 + $0x58] sm:$0xff]
    %v125 = vld [vmem:[#allocation5 + $0x60] sm:$0xff]
    %v126 = vld [vmem:[#allocation5 + $0x68] sm:$0xff]
    %v127 = vld [vmem:[#allocation5 + $0x70] sm:$0xff]
    %v128 = vld [vmem:[#allocation5 + $0x78] sm:$0xff]
    %v129 = vld [vmem:[#allocation5 + $0x80] sm:$0xff]
    %v130 = vld [vmem:[#allocation5 + $0x88] sm:$0xff]
    %v131 = vld [vmem:[#allocation5 + $0x90] sm:$0xff]
    %v132 = vld [vmem:[#allocation5 + $0x98] sm:$0xff]
    %v133 = vld [vmem:[#allocation5 + $0xa0] sm:$0xff]
    %v134 = vld [vmem:[#allocation5 + $0xa8] sm:$0xff]
    %v135 = vld [vmem:[#allocation5 + $0xb0] sm:$0xff]
    %v136 = vld [vmem:[#allocation5 + $0xb8] sm:$0xff]
    %v137 = vld [vmem:[#allocation5 + $0xc0] sm:$0xff]
    %v138 = vld [vmem:[#allocation5 + $0xc8] sm:$0xff]
    %v139 = vld [vmem:[#allocation5 + $0xd0] sm:$0xff]
    %v140 = vld [vmem:[#allocation5 + $0xd8] sm:$0xff]
    %v141 = vld [vmem:[#allocation5 + $0xe0] sm:$0xff]
    %v142 = vld [vmem:[#allocation5 + $0xe8] sm:$0xff]
    %v143 = vld [vmem:[#allocation5 + $0xf0] sm:$0xff]
    %v144 = vld [vmem:[#allocation5 + $0xf8] sm:$0xff]
    %v145 = vld [vmem:[#allocation5 + $0x100] sm:$0xff]
    %v146 = vld [vmem:[#allocation5 + $0x108] sm:$0xff]
    %v147 = vld [vmem:[#allocation5 + $0x110] sm:$0xff]
    %v148 = vld [vmem:[#allocation5 + $0x118] sm:$0xff]
    %v149 = vld [vmem:[#allocation5 + $0x120] sm:$0xff]
    %v150 = vld [vmem:[#allocation5 + $0x128] sm:$0xff]
    %v151 = vld [vmem:[#allocation5 + $0x130] sm:$0xff]
    %v152 = vld [vmem:[#allocation5 + $0x138] sm:$0xff]
    %v153 = vld [vmem:[#allocation5 + $0x140] sm:$0xff]
    %v154 = vld [vmem:[#allocation5 + $0x148] sm:$0xff]
    %v155 = vld [vmem:[#allocation5 + $0x150] sm:$0xff]
    %v156 = vld [vmem:[#allocation5 + $0x158] sm:$0xff]
    %v157 = vld [vmem:[#allocation5 + $0x160] sm:$0xff]
    %v158 = vld [vmem:[#allocation5 + $0x168] sm:$0xff]
    %v159 = vld [vmem:[#allocation5 + $0x170] sm:$0xff]
    %v160 = vld [vmem:[#allocation5 + $0x178] sm:$0xff]
    %v161 = vld [vmem:[#allocation5 + $0x180] sm:$0xff]
    %v162 = vld [vmem:[#allocation5 + $0x188] sm:$0xff]
    %v163 = vld [vmem:[#allocation5 + $0x190] sm:$0xff]
    %v164 = vld [vmem:[#allocation5 + $0x198] sm:$0xff]
    %v165 = vld [vmem:[#allocation5 + $0x1a0] sm:$0xff]
    %v166 = vld [vmem:[#allocation5 + $0x1a8] sm:$0xff]
    %v167 = vld [vmem:[#allocation5 + $0x1b0] sm:$0xff]
    %v168 = vld [vmem:[#allocation5 + $0x1b8] sm:$0xff]
    %v169 = vld [vmem:[#allocation5 + $0x1c0] sm:$0xff]
    %v170 = vld [vmem:[#allocation5 + $0x1c8] sm:$0xff]
    %v171 = vld [vmem:[#allocation5 + $0x1d0] sm:$0xff]
    %v172 = vld [vmem:[#allocation5 + $0x1d8] sm:$0xff]
    %v173 = vld [vmem:[#allocation5 + $0x1e0] sm:$0xff]
    %v174 = vld [vmem:[#allocation5 + $0x1e8] sm:$0xff]
    %v175 = vld [vmem:[#allocation5 + $0x1f0] sm:$0xff]
    %v176 = vld [vmem:[#allocation5 + $0x1f8] sm:$0xff]
    %v177 = vld [vmem:[#allocation5 + $0x200] sm:$0xff]
    %v178 = vld [vmem:[#allocation5 + $0x208] sm:$0xff]
    %v179 = vld [vmem:[#allocation5 + $0x210] sm:$0xff]
    %v180 = vld [vmem:[#allocation5 + $0x218] sm:$0xff]
    %v181 = vld [vmem:[#allocation5 + $0x220] sm:$0xff]
    %v182 = vld [vmem:[#allocation5 + $0x228] sm:$0xff]
    %v183 = vld [vmem:[#allocation5 + $0x230] sm:$0xff]
    %v184 = vld [vmem:[#allocation5 + $0x238] sm:$0xff]
    %v185 = vld [vmem:[#allocation5 + $0x240] sm:$0xff]
    %v186 = vld [vmem:[#allocation5 + $0x248] sm:$0xff]
    %v187 = vld [vmem:[#allocation5 + $0x250] sm:$0xff]
    %v188 = vld [vmem:[#allocation5 + $0x258] sm:$0xff]
    %v189 = vld [vmem:[#allocation5 + $0x260] sm:$0xff]
    %v190 = vld [vmem:[#allocation5 + $0x268] sm:$0xff]
    %v191 = vld [vmem:[#allocation5 + $0x270] sm:$0xff]
    %v192 = vld [vmem:[#allocation5 + $0x278] sm:$0xff]
    %v193 = vld [vmem:[#allocation5 + $0x280] sm:$0xff]
    %v194 = vld [vmem:[#allocation5 + $0x288] sm:$0xff]
    %v195 = vld [vmem:[#allocation5 + $0x290] sm:$0xff]
    %v196 = vld [vmem:[#allocation5 + $0x298] sm:$0xff]
    %v197 = vld [vmem:[#allocation5 + $0x2a0] sm:$0xff]
    %v198 = vld [vmem:[#allocation5 + $0x2a8] sm:$0xff]
    %v199 = vld [vmem:[#allocation5 + $0x2b0] sm:$0xff]
    %v200 = vld [vmem:[#allocation5 + $0x2b8] sm:$0xff]
    %v201 = vld [vmem:[#allocation5 + $0x2c0] sm:$0xff]
    %v202 = vld [vmem:[#allocation5 + $0x2c8] sm:$0xff]
    %v203 = vld [vmem:[#allocation5 + $0x2d0] sm:$0xff]
    %v204 = vld [vmem:[#allocation5 + $0x2d8] sm:$0xff]
    %v205 = vld [vmem:[#allocation5 + $0x2e0] sm:$0xff]
    %v206 = vld [vmem:[#allocation5 + $0x2e8] sm:$0xff]
    %v207 = vld [vmem:[#allocation5 + $0x2f0] sm:$0xff]
    %v208 = vld [vmem:[#allocation5 + $0x2f8] sm:$0xff]
    %v209 = vld [vmem:[#allocation5 + $0x300] sm:$0xff]
    %v210 = vld [vmem:[#allocation5 + $0x308] sm:$0xff]
    %v211 = vld [vmem:[#allocation5 + $0x310] sm:$0xff]
    %v212 = vld [vmem:[#allocation5 + $0x318] sm:$0xff]
    %v213 = vld [vmem:[#allocation5 + $0x320] sm:$0xff]
    %v214 = vld [vmem:[#allocation5 + $0x328] sm:$0xff]
    %v215 = vld [vmem:[#allocation5 + $0x330] sm:$0xff]
    %v216 = vld [vmem:[#allocation5 + $0x338] sm:$0xff]
    %v217 = vld [vmem:[#allocation5 + $0x340] sm:$0xff]
    %v218 = vld [vmem:[#allocation5 + $0x348] sm:$0xff]
    %v219 = vld [vmem:[#allocation5 + $0x350] sm:$0xff]
    %v220 = vld [vmem:[#allocation5 + $0x358] sm:$0xff]
    %v221 = vld [vmem:[#allocation5 + $0x360] sm:$0xff]
    %v222 = vld [vmem:[#allocation5 + $0x368] sm:$0xff]
    %v223 = vld [vmem:[#allocation5 + $0x370] sm:$0xff]
    %v224 = vld [vmem:[#allocation5 + $0x378] sm:$0xff]
    %v225 = vld [vmem:[#allocation5 + $0x380] sm:$0xff]
    %v226 = vld [vmem:[#allocation5 + $0x388] sm:$0xff]
    %v227 = vld [vmem:[#allocation5 + $0x390] sm:$0xff]
    %v228 = vld [vmem:[#allocation5 + $0x398] sm:$0xff]
    %v229 = vld [vmem:[#allocation5 + $0x3a0] sm:$0xff]
    %v230 = vld [vmem:[#allocation5 + $0x3a8] sm:$0xff]
    %v231 = vld [vmem:[#allocation5 + $0x3b0] sm:$0xff]
    %v232 = vld [vmem:[#allocation5 + $0x3b8] sm:$0xff]
    %v233 = vld [vmem:[#allocation5 + $0x3c0] sm:$0xff]
    %v234 = vld [vmem:[#allocation5 + $0x3c8] sm:$0xff]
    %v235 = vld [vmem:[#allocation5 + $0x3d0] sm:$0xff]
    %v236 = vld [vmem:[#allocation5 + $0x3d8] sm:$0xff]
    %v237 = vld [vmem:[#allocation5 + $0x3e0] sm:$0xff]
    %v238 = vld [vmem:[#allocation5 + $0x3e8] sm:$0xff]
    %v239 = vld [vmem:[#allocation5 + $0x3f0] sm:$0xff]
    %v240 = vld [vmem:[#allocation5 + $0x3f8] sm:$0xff]
    %v241 = vld [vmem:[#allocation5 + $0x400] sm:$0xff]
    %v242 = vld [vmem:[#allocation5 + $0x408] sm:$0xff]
    %v243 = vld [vmem:[#allocation5 + $0x410] sm:$0xff]
    %v244 = vld [vmem:[#allocation5 + $0x418] sm:$0xff]
    %v245 = vld [vmem:[#allocation5 + $0x420] sm:$0xff]
    %v246 = vld [vmem:[#allocation5 + $0x428] sm:$0xff]
    %v247 = vld [vmem:[#allocation5 + $0x430] sm:$0xff]
    %v248 = vld [vmem:[#allocation5 + $0x438] sm:$0xff]
    %v249 = vld [vmem:[#allocation5 + $0x440] sm:$0xff]
    %v250 = vld [vmem:[#allocation5 + $0x448] sm:$0xff]
    %v251 = vld [vmem:[#allocation5 + $0x450] sm:$0xff]
    %v252 = vld [vmem:[#allocation5 + $0x458] sm:$0xff]
    %v253 = vld [vmem:[#allocation5 + $0x460] sm:$0xff]
    %v254 = vld [vmem:[#allocation5 + $0x468] sm:$0xff]
    %v255 = vld [vmem:[#allocation5 + $0x470] sm:$0xff]
    %v256 = vld [vmem:[#allocation5 + $0x478] sm:$0xff]
    %v257 = vld [vmem:[#allocation5 + $0x480] sm:$0xff]
    %v258 = vld [vmem:[#allocation5 + $0x488] sm:$0xff]
    %v259 = vld [vmem:[#allocation5 + $0x490] sm:$0xff]
    %v260 = vld [vmem:[#allocation5 + $0x498] sm:$0xff]
    %v261 = vld [vmem:[#allocation5 + $0x4a0] sm:$0xff]
    %v262 = vld [vmem:[#allocation5 + $0x4a8] sm:$0xff]
    %v263 = vld [vmem:[#allocation5 + $0x4b0] sm:$0xff]
    %v264 = vld [vmem:[#allocation5 + $0x4b8] sm:$0xff]
    %v265 = vld [vmem:[#allocation5 + $0x4c0] sm:$0xff]
    %v266 = vld [vmem:[#allocation5 + $0x4c8] sm:$0xff]
    %v267 = vld [vmem:[#allocation5 + $0x4d0] sm:$0xff]
    %v268 = vld [vmem:[#allocation5 + $0x4d8] sm:$0xff]
    %v269 = vld [vmem:[#allocation5 + $0x4e0] sm:$0xff]
    %v270 = vld [vmem:[#allocation5 + $0x4e8] sm:$0xff]
    %v271 = vld [vmem:[#allocation5 + $0x4f0] sm:$0xff]
    %v272 = vld [vmem:[#allocation5 + $0x4f8] sm:$0xff]
    %v273 = vld [vmem:[#allocation5 + $0x500] sm:$0xff]
    %v274 = vld [vmem:[#allocation5 + $0x508] sm:$0xff]
    %v275 = vld [vmem:[#allocation5 + $0x510] sm:$0xff]
    %v276 = vld [vmem:[#allocation5 + $0x518] sm:$0xff]
    %v277 = vld [vmem:[#allocation5 + $0x520] sm:$0xff]
    %v278 = vld [vmem:[#allocation5 + $0x528] sm:$0xff]
    %v279 = vld [vmem:[#allocation5 + $0x530] sm:$0xff]
    %v280 = vld [vmem:[#allocation5 + $0x538] sm:$0xff]
    %v281 = vld [vmem:[#allocation5 + $0x540] sm:$0xff]
    %v282 = vld [vmem:[#allocation5 + $0x548] sm:$0xff]
    %v283 = vld [vmem:[#allocation5 + $0x550] sm:$0xff]
    %v284 = vld [vmem:[#allocation5 + $0x558] sm:$0xff]
    %v285 = vld [vmem:[#allocation5 + $0x560] sm:$0xff]
    %v286 = vld [vmem:[#allocation5 + $0x568] sm:$0xff]
    %v287 = vld [vmem:[#allocation5 + $0x570] sm:$0xff]
    %v288 = vld [vmem:[#allocation5 + $0x578] sm:$0xff]
    %v289 = vld [vmem:[#allocation5 + $0x580] sm:$0xff]
    %v290 = vld [vmem:[#allocation5 + $0x588] sm:$0xff]
    %v291 = vld [vmem:[#allocation5 + $0x590] sm:$0xff]
    %v292 = vld [vmem:[#allocation5 + $0x598] sm:$0xff]
    %v293 = vld [vmem:[#allocation5 + $0x5a0] sm:$0xff]
    %v294 = vld [vmem:[#allocation5 + $0x5a8] sm:$0xff]
    %v295 = vld [vmem:[#allocation5 + $0x5b0] sm:$0xff]
    %v296 = vld [vmem:[#allocation5 + $0x5b8] sm:$0xff]
    %v297 = vld [vmem:[#allocation5 + $0x5c0] sm:$0xff]
    %v298 = vld [vmem:[#allocation5 + $0x5c8] sm:$0xff]
    %v299 = vld [vmem:[#allocation5 + $0x5d0] sm:$0xff]
    %v300 = vld [vmem:[#allocation5 + $0x5d8] sm:$0xff]
    %v301 = vld [vmem:[#allocation5 + $0x5e0] sm:$0xff]
    %v302 = vld [vmem:[#allocation5 + $0x5e8] sm:$0xff]
    %v303 = vld [vmem:[#allocation5 + $0x5f0] sm:$0xff]
    %v304 = vld [vmem:[#allocation5 + $0x5f8] sm:$0xff]
    %v305 = vld [vmem:[#allocation5 + $0x600] sm:$0xff]
    %v306 = vld [vmem:[#allocation5 + $0x608] sm:$0xff]
    %v307 = vld [vmem:[#allocation5 + $0x610] sm:$0xff]
    %v308 = vld [vmem:[#allocation5 + $0x618] sm:$0xff]
    %v309 = vld [vmem:[#allocation5 + $0x620] sm:$0xff]
    %v310 = vld [vmem:[#allocation5 + $0x628] sm:$0xff]
    %v311 = vld [vmem:[#allocation5 + $0x630] sm:$0xff]
    %v312 = vld [vmem:[#allocation5 + $0x638] sm:$0xff]
    %v313 = vld [vmem:[#allocation5 + $0x640] sm:$0xff]
    %v314 = vld [vmem:[#allocation5 + $0x648] sm:$0xff]
    %v315 = vld [vmem:[#allocation5 + $0x650] sm:$0xff]
    %v316 = vld [vmem:[#allocation5 + $0x658] sm:$0xff]
    %v317 = vld [vmem:[#allocation5 + $0x660] sm:$0xff]
    %v318 = vld [vmem:[#allocation5 + $0x668] sm:$0xff]
    %v319 = vld [vmem:[#allocation5 + $0x670] sm:$0xff]
    %v320 = vld [vmem:[#allocation5 + $0x678] sm:$0xff]
    %v321 = vld [vmem:[#allocation5 + $0x680] sm:$0xff]
    %v322 = vld [vmem:[#allocation5 + $0x688] sm:$0xff]
    %v323 = vld [vmem:[#allocation5 + $0x690] sm:$0xff]
    %v324 = vld [vmem:[#allocation5 + $0x698] sm:$0xff]
    %v325 = vld [vmem:[#allocation5 + $0x6a0] sm:$0xff]
    %v326 = vld [vmem:[#allocation5 + $0x6a8] sm:$0xff]
    %v327 = vld [vmem:[#allocation5 + $0x6b0] sm:$0xff]
    %v328 = vld [vmem:[#allocation5 + $0x6b8] sm:$0xff]
    %v329 = vld [vmem:[#allocation5 + $0x6c0] sm:$0xff]
    %v330 = vld [vmem:[#allocation5 + $0x6c8] sm:$0xff]
    %v331 = vld [vmem:[#allocation5 + $0x6d0] sm:$0xff]
    %v332 = vld [vmem:[#allocation5 + $0x6d8] sm:$0xff]
    %v333 = vld [vmem:[#allocation5 + $0x6e0] sm:$0xff]
    %v334 = vld [vmem:[#allocation5 + $0x6e8] sm:$0xff]
    %v335 = vld [vmem:[#allocation5 + $0x6f0] sm:$0xff]
    %v336 = vld [vmem:[#allocation5 + $0x6f8] sm:$0xff]
    %v337 = vld [vmem:[#allocation5 + $0x700] sm:$0xff]
    %v338 = vld [vmem:[#allocation5 + $0x708] sm:$0xff]
    %v339 = vld [vmem:[#allocation5 + $0x710] sm:$0xff]
    %v340 = vld [vmem:[#allocation5 + $0x718] sm:$0xff]
    %v341 = vld [vmem:[#allocation5 + $0x720] sm:$0xff]
    %v342 = vld [vmem:[#allocation5 + $0x728] sm:$0xff]
    %v343 = vld [vmem:[#allocation5 + $0x730] sm:$0xff]
    %v344 = vld [vmem:[#allocation5 + $0x738] sm:$0xff]
    %v345 = vld [vmem:[#allocation5 + $0x740] sm:$0xff]
    %v346 = vld [vmem:[#allocation5 + $0x748] sm:$0xff]
    %v347 = vld [vmem:[#allocation5 + $0x750] sm:$0xff]
    %v348 = vld [vmem:[#allocation5 + $0x758] sm:$0xff]
    %v349 = vld [vmem:[#allocation5 + $0x760] sm:$0xff]
    %v350 = vld [vmem:[#allocation5 + $0x768] sm:$0xff]
    %v351 = vld [vmem:[#allocation5 + $0x770] sm:$0xff]
    %v352 = vld [vmem:[#allocation5 + $0x778] sm:$0xff]
    %v353 = vld [vmem:[#allocation5 + $0x780] sm:$0xff]
    %v354 = vld [vmem:[#allocation5 + $0x788] sm:$0xff]
    %v355 = vld [vmem:[#allocation5 + $0x790] sm:$0xff]
    %v356 = vld [vmem:[#allocation5 + $0x798] sm:$0xff]
    %v357 = vld [vmem:[#allocation5 + $0x7a0] sm:$0xff]
    %v358 = vld [vmem:[#allocation5 + $0x7a8] sm:$0xff]
    %v359 = vld [vmem:[#allocation5 + $0x7b0] sm:$0xff]
    %v360 = vld [vmem:[#allocation5 + $0x7b8] sm:$0xff]
    %v361 = vld [vmem:[#allocation5 + $0x7c0] sm:$0xff]
    %v362 = vld [vmem:[#allocation5 + $0x7c8] sm:$0xff]
    %v363 = vld [vmem:[#allocation5 + $0x7d0] sm:$0xff]
    %v364 = vld [vmem:[#allocation5 + $0x7d8] sm:$0xff]
    %v365 = vld [vmem:[#allocation5 + $0x7e0] sm:$0xff]
    %v366 = vld [vmem:[#allocation5 + $0x7e8] sm:$0xff]
    %v367 = vld [vmem:[#allocation5 + $0x7f0] sm:$0xff]
    %v368 = vld [vmem:[#allocation5 + $0x7f8] sm:$0xff]
    %v369 = vld [vmem:[#allocation5 + $0x800] sm:$0xff]
    %v370 = vld [vmem:[#allocation5 + $0x808] sm:$0xff]
    %v371 = vld [vmem:[#allocation5 + $0x810] sm:$0xff]
    %v372 = vld [vmem:[#allocation5 + $0x818] sm:$0xff]
    %v373 = vld [vmem:[#allocation5 + $0x820] sm:$0xff]
    %v374 = vld [vmem:[#allocation5 + $0x828] sm:$0xff]
    %v375 = vld [vmem:[#allocation5 + $0x830] sm:$0xff]
    %v376 = vld [vmem:[#allocation5 + $0x838] sm:$0xff]
    %v377 = vld [vmem:[#allocation5 + $0x840] sm:$0xff]
    %v378 = vld [vmem:[#allocation5 + $0x848] sm:$0xff]
    %v379 = vld [vmem:[#allocation5 + $0x850] sm:$0xff]
    %v380 = vld [vmem:[#allocation5 + $0x858] sm:$0xff]
    %v381 = vld [vmem:[#allocation5 + $0x860] sm:$0xff]
    %v382 = vld [vmem:[#allocation5 + $0x868] sm:$0xff]
    %v383 = vld [vmem:[#allocation5 + $0x870] sm:$0xff]
    %v384 = vld [vmem:[#allocation5 + $0x878] sm:$0xff]
    %v385 = vld [vmem:[#allocation5 + $0x880] sm:$0xff]
    %v386 = vld [vmem:[#allocation5 + $0x888] sm:$0xff]
    %v387 = vld [vmem:[#allocation5 + $0x890] sm:$0xff]
    %v388 = vld [vmem:[#allocation5 + $0x898] sm:$0xff]
    %v389 = vld [vmem:[#allocation5 + $0x8a0] sm:$0xff]
    %v390 = vld [vmem:[#allocation5 + $0x8a8] sm:$0xff]
    %v391 = vld [vmem:[#allocation5 + $0x8b0] sm:$0xff]
    %v392 = vld [vmem:[#allocation5 + $0x8b8] sm:$0xff]
    %v393 = vld [vmem:[#allocation5 + $0x8c0] sm:$0xff]
    %v394 = vld [vmem:[#allocation5 + $0x8c8] sm:$0xff]
    %v395 = vld [vmem:[#allocation5 + $0x8d0] sm:$0xff]
    %v396 = vld [vmem:[#allocation5 + $0x8d8] sm:$0xff]
    %v397 = vld [vmem:[#allocation5 + $0x8e0] sm:$0xff]
    %v398 = vld [vmem:[#allocation5 + $0x8e8] sm:$0xff]
    %v399 = vld [vmem:[#allocation5 + $0x8f0] sm:$0xff]
    %v400 = vld [vmem:[#allocation5 + $0x8f8] sm:$0xff]
    %v401 = vld [vmem:[#allocation7] sm:$0x3f]
    %v403 = vlaneseq
    %v404 = vshrl.u32 %v403, 7
    %v405 = vsub.s32 0, %v404
    %v406 = vrot.slane %v401, %v405
    %v407 = vlaneseq
    %v408 = vshrl.u32 %v407, 7
    %v409 = vsub.s32 1, %v408
    %v410 = vrot.slane %v401, %v409
    %v411 = vlaneseq
    %v412 = vshrl.u32 %v411, 7
    %v413 = vsub.s32 2, %v412
    %v414 = vrot.slane %v401, %v413
    %v415 = vlaneseq
    %v416 = vshrl.u32 %v415, 7
    %v417 = vsub.s32 3, %v416
    %v418 = vrot.slane %v401, %v417
    %v419 = vlaneseq
    %v420 = vshrl.u32 %v419, 7
    %v421 = vsub.s32 4, %v420
    %v422 = vrot.slane %v401, %v421
    %v423 = vlaneseq
    %v424 = vshrl.u32 %v423, 7
    %v425 = vsub.s32 5, %v424
    %v426 = vrot.slane %v401, %v425
    %v721 = vunpack.c.l.b16 %v113
    %v722 = vunpack.c.h.b16 %v113
    %v723 = vunpack.c.l.b16 %v114
    %v724 = vunpack.c.h.b16 %v114
    %v725 = vunpack.c.l.b16 %v115
    %v726 = vunpack.c.h.b16 %v115
    %v727 = vunpack.c.l.b16 %v116
    %v728 = vunpack.c.h.b16 %v116
    %v729 = vunpack.c.l.b16 %v117
    %v730 = vunpack.c.h.b16 %v117
    %v731 = vunpack.c.l.b16 %v118
    %v732 = vunpack.c.h.b16 %v118
    %v733 = vunpack.c.l.b16 %v119
    %v734 = vunpack.c.h.b16 %v119
    %v735 = vunpack.c.l.b16 %v120
    %v736 = vunpack.c.h.b16 %v120
    %v737 = vunpack.c.l.b16 %v121
    %v738 = vunpack.c.h.b16 %v121
    %v739 = vunpack.c.l.b16 %v122
    %v740 = vunpack.c.h.b16 %v122
    %v741 = vunpack.c.l.b16 %v123
    %v742 = vunpack.c.h.b16 %v123
    %v743 = vunpack.c.l.b16 %v124
    %v744 = vunpack.c.h.b16 %v124
    %v745 = vunpack.c.l.b16 %v125
    %v746 = vunpack.c.h.b16 %v125
    %v747 = vunpack.c.l.b16 %v126
    %v748 = vunpack.c.h.b16 %v126
    %v749 = vunpack.c.l.b16 %v127
    %v750 = vunpack.c.h.b16 %v127
    %v751 = vunpack.c.l.b16 %v128
    %v752 = vunpack.c.h.b16 %v128
    %v753 = vunpack.c.l.b16 %v129
    %v754 = vunpack.c.h.b16 %v129
    %v755 = vunpack.c.l.b16 %v130
    %v756 = vunpack.c.h.b16 %v130
    %v757 = vunpack.c.l.b16 %v131
    %v758 = vunpack.c.h.b16 %v131
    %v759 = vunpack.c.l.b16 %v132
    %v760 = vunpack.c.h.b16 %v132
    %v761 = vunpack.c.l.b16 %v133
    %v762 = vunpack.c.h.b16 %v133
    %v763 = vunpack.c.l.b16 %v134
    %v764 = vunpack.c.h.b16 %v134
    %v765 = vunpack.c.l.b16 %v135
    %v766 = vunpack.c.h.b16 %v135
    %v767 = vunpack.c.l.b16 %v136
    %v768 = vunpack.c.h.b16 %v136
    %v769 = vunpack.c.l.b16 %v137
    %v770 = vunpack.c.h.b16 %v137
    %v771 = vunpack.c.l.b16 %v138
    %v772 = vunpack.c.h.b16 %v138
    %v773 = vunpack.c.l.b16 %v139
    %v774 = vunpack.c.h.b16 %v139
    %v775 = vunpack.c.l.b16 %v140
    %v776 = vunpack.c.h.b16 %v140
    %v777 = vunpack.c.l.b16 %v141
    %v778 = vunpack.c.h.b16 %v141
    %v779 = vunpack.c.l.b16 %v142
    %v780 = vunpack.c.h.b16 %v142
    %v781 = vunpack.c.l.b16 %v143
    %v782 = vunpack.c.h.b16 %v143
    %v783 = vunpack.c.l.b16 %v144
    %v784 = vunpack.c.h.b16 %v144
    %v785 = vunpack.c.l.b16 %v145
    %v786 = vunpack.c.h.b16 %v145
    %v787 = vunpack.c.l.b16 %v146
    %v788 = vunpack.c.h.b16 %v146
    %v789 = vunpack.c.l.b16 %v147
    %v790 = vunpack.c.h.b16 %v147
    %v791 = vunpack.c.l.b16 %v148
    %v792 = vunpack.c.h.b16 %v148
    %v793 = vunpack.c.l.b16 %v149
    %v794 = vunpack.c.h.b16 %v149
    %v795 = vunpack.c.l.b16 %v150
    %v796 = vunpack.c.h.b16 %v150
    %v797 = vunpack.c.l.b16 %v151
    %v798 = vunpack.c.h.b16 %v151
    %v799 = vunpack.c.l.b16 %v152
    %v800 = vunpack.c.h.b16 %v152
    %v801 = vunpack.c.l.b16 %v153
    %v802 = vunpack.c.h.b16 %v153
    %v803 = vunpack.c.l.b16 %v154
    %v804 = vunpack.c.h.b16 %v154
    %v805 = vunpack.c.l.b16 %v155
    %v806 = vunpack.c.h.b16 %v155
    %v807 = vunpack.c.l.b16 %v156
    %v808 = vunpack.c.h.b16 %v156
    %v809 = vunpack.c.l.b16 %v157
    %v810 = vunpack.c.h.b16 %v157
    %v811 = vunpack.c.l.b16 %v158
    %v812 = vunpack.c.h.b16 %v158
    %v813 = vunpack.c.l.b16 %v159
    %v814 = vunpack.c.h.b16 %v159
    %v815 = vunpack.c.l.b16 %v160
    %v816 = vunpack.c.h.b16 %v160
    %v817 = vunpack.c.l.b16 %v161
    %v818 = vunpack.c.h.b16 %v161
    %v819 = vunpack.c.l.b16 %v162
    %v820 = vunpack.c.h.b16 %v162
    %v821 = vunpack.c.l.b16 %v163
    %v822 = vunpack.c.h.b16 %v163
    %v823 = vunpack.c.l.b16 %v164
    %v824 = vunpack.c.h.b16 %v164
    %v825 = vunpack.c.l.b16 %v165
    %v826 = vunpack.c.h.b16 %v165
    %v827 = vunpack.c.l.b16 %v166
    %v828 = vunpack.c.h.b16 %v166
    %v829 = vunpack.c.l.b16 %v167
    %v830 = vunpack.c.h.b16 %v167
    %v831 = vunpack.c.l.b16 %v168
    %v832 = vunpack.c.h.b16 %v168
    %v833 = vunpack.c.l.b16 %v169
    %v834 = vunpack.c.h.b16 %v169
    %v835 = vunpack.c.l.b16 %v170
    %v836 = vunpack.c.h.b16 %v170
    %v837 = vunpack.c.l.b16 %v171
    %v838 = vunpack.c.h.b16 %v171
    %v839 = vunpack.c.l.b16 %v172
    %v840 = vunpack.c.h.b16 %v172
    %v841 = vunpack.c.l.b16 %v173
    %v842 = vunpack.c.h.b16 %v173
    %v843 = vunpack.c.l.b16 %v174
    %v844 = vunpack.c.h.b16 %v174
    %v845 = vunpack.c.l.b16 %v175
    %v846 = vunpack.c.h.b16 %v175
    %v847 = vunpack.c.l.b16 %v176
    %v848 = vunpack.c.h.b16 %v176
    %v849 = vunpack.c.l.b16 %v177
    %v850 = vunpack.c.h.b16 %v177
    %v851 = vunpack.c.l.b16 %v178
    %v852 = vunpack.c.h.b16 %v178
    %v853 = vunpack.c.l.b16 %v179
    %v854 = vunpack.c.h.b16 %v179
    %v855 = vunpack.c.l.b16 %v180
    %v856 = vunpack.c.h.b16 %v180
    %v857 = vunpack.c.l.b16 %v181
    %v858 = vunpack.c.h.b16 %v181
    %v859 = vunpack.c.l.b16 %v182
    %v860 = vunpack.c.h.b16 %v182
    %v861 = vunpack.c.l.b16 %v183
    %v862 = vunpack.c.h.b16 %v183
    %v863 = vunpack.c.l.b16 %v184
    %v864 = vunpack.c.h.b16 %v184
    %v865 = vunpack.c.l.b16 %v185
    %v866 = vunpack.c.h.b16 %v185
    %v867 = vunpack.c.l.b16 %v186
    %v868 = vunpack.c.h.b16 %v186
    %v869 = vunpack.c.l.b16 %v187
    %v870 = vunpack.c.h.b16 %v187
    %v871 = vunpack.c.l.b16 %v188
    %v872 = vunpack.c.h.b16 %v188
    %v873 = vunpack.c.l.b16 %v189
    %v874 = vunpack.c.h.b16 %v189
    %v875 = vunpack.c.l.b16 %v190
    %v876 = vunpack.c.h.b16 %v190
    %v877 = vunpack.c.l.b16 %v191
    %v878 = vunpack.c.h.b16 %v191
    %v879 = vunpack.c.l.b16 %v192
    %v880 = vunpack.c.h.b16 %v192
    %v881 = vunpack.c.l.b16 %v193
    %v882 = vunpack.c.h.b16 %v193
    %v883 = vunpack.c.l.b16 %v194
    %v884 = vunpack.c.h.b16 %v194
    %v885 = vunpack.c.l.b16 %v195
    %v886 = vunpack.c.h.b16 %v195
    %v887 = vunpack.c.l.b16 %v196
    %v888 = vunpack.c.h.b16 %v196
    %v889 = vunpack.c.l.b16 %v197
    %v890 = vunpack.c.h.b16 %v197
    %v891 = vunpack.c.l.b16 %v198
    %v892 = vunpack.c.h.b16 %v198
    %v893 = vunpack.c.l.b16 %v199
    %v894 = vunpack.c.h.b16 %v199
    %v895 = vunpack.c.l.b16 %v200
    %v896 = vunpack.c.h.b16 %v200
    %v897 = vunpack.c.l.b16 %v201
    %v898 = vunpack.c.h.b16 %v201
    %v899 = vunpack.c.l.b16 %v202
    %v900 = vunpack.c.h.b16 %v202
    %v901 = vunpack.c.l.b16 %v203
    %v902 = vunpack.c.h.b16 %v203
    %v903 = vunpack.c.l.b16 %v204
    %v904 = vunpack.c.h.b16 %v204
    %v905 = vunpack.c.l.b16 %v205
    %v906 = vunpack.c.h.b16 %v205
    %v907 = vunpack.c.l.b16 %v206
    %v908 = vunpack.c.h.b16 %v206
    %v909 = vunpack.c.l.b16 %v207
    %v910 = vunpack.c.h.b16 %v207
    %v911 = vunpack.c.l.b16 %v208
    %v912 = vunpack.c.h.b16 %v208
    %v913 = vunpack.c.l.b16 %v209
    %v914 = vunpack.c.h.b16 %v209
    %v915 = vunpack.c.l.b16 %v210
    %v916 = vunpack.c.h.b16 %v210
    %v917 = vunpack.c.l.b16 %v211
    %v918 = vunpack.c.h.b16 %v211
    %v919 = vunpack.c.l.b16 %v212
    %v920 = vunpack.c.h.b16 %v212
    %v921 = vunpack.c.l.b16 %v213
    %v922 = vunpack.c.h.b16 %v213
    %v923 = vunpack.c.l.b16 %v214
    %v924 = vunpack.c.h.b16 %v214
    %v925 = vunpack.c.l.b16 %v215
    %v926 = vunpack.c.h.b16 %v215
    %v927 = vunpack.c.l.b16 %v216
    %v928 = vunpack.c.h.b16 %v216
    %v929 = vunpack.c.l.b16 %v217
    %v930 = vunpack.c.h.b16 %v217
    %v931 = vunpack.c.l.b16 %v218
    %v932 = vunpack.c.h.b16 %v218
    %v933 = vunpack.c.l.b16 %v219
    %v934 = vunpack.c.h.b16 %v219
    %v935 = vunpack.c.l.b16 %v220
    %v936 = vunpack.c.h.b16 %v220
    %v937 = vunpack.c.l.b16 %v221
    %v938 = vunpack.c.h.b16 %v221
    %v939 = vunpack.c.l.b16 %v222
    %v940 = vunpack.c.h.b16 %v222
    %v941 = vunpack.c.l.b16 %v223
    %v942 = vunpack.c.h.b16 %v223
    %v943 = vunpack.c.l.b16 %v224
    %v944 = vunpack.c.h.b16 %v224
    %v945 = vunpack.c.l.b16 %v225
    %v946 = vunpack.c.h.b16 %v225
    %v947 = vunpack.c.l.b16 %v226
    %v948 = vunpack.c.h.b16 %v226
    %v949 = vunpack.c.l.b16 %v227
    %v950 = vunpack.c.h.b16 %v227
    %v951 = vunpack.c.l.b16 %v228
    %v952 = vunpack.c.h.b16 %v228
    %v953 = vunpack.c.l.b16 %v229
    %v954 = vunpack.c.h.b16 %v229
    %v955 = vunpack.c.l.b16 %v230
    %v956 = vunpack.c.h.b16 %v230
    %v957 = vunpack.c.l.b16 %v231
    %v958 = vunpack.c.h.b16 %v231
    %v959 = vunpack.c.l.b16 %v232
    %v960 = vunpack.c.h.b16 %v232
    %v961 = vunpack.c.l.b16 %v233
    %v962 = vunpack.c.h.b16 %v233
    %v963 = vunpack.c.l.b16 %v234
    %v964 = vunpack.c.h.b16 %v234
    %v965 = vunpack.c.l.b16 %v235
    %v966 = vunpack.c.h.b16 %v235
    %v967 = vunpack.c.l.b16 %v236
    %v968 = vunpack.c.h.b16 %v236
    %v969 = vunpack.c.l.b16 %v237
    %v970 = vunpack.c.h.b16 %v237
    %v971 = vunpack.c.l.b16 %v238
    %v972 = vunpack.c.h.b16 %v238
    %v973 = vunpack.c.l.b16 %v239
    %v974 = vunpack.c.h.b16 %v239
    %v975 = vunpack.c.l.b16 %v240
    %v976 = vunpack.c.h.b16 %v240
    %v977 = vunpack.c.l.b16 %v241
    %v978 = vunpack.c.h.b16 %v241
    %v979 = vunpack.c.l.b16 %v242
    %v980 = vunpack.c.h.b16 %v242
    %v981 = vunpack.c.l.b16 %v243
    %v982 = vunpack.c.h.b16 %v243
    %v983 = vunpack.c.l.b16 %v244
    %v984 = vunpack.c.h.b16 %v244
    %v985 = vunpack.c.l.b16 %v245
    %v986 = vunpack.c.h.b16 %v245
    %v987 = vunpack.c.l.b16 %v246
    %v988 = vunpack.c.h.b16 %v246
    %v989 = vunpack.c.l.b16 %v247
    %v990 = vunpack.c.h.b16 %v247
    %v991 = vunpack.c.l.b16 %v248
    %v992 = vunpack.c.h.b16 %v248
    %v993 = vunpack.c.l.b16 %v249
    %v994 = vunpack.c.h.b16 %v249
    %v995 = vunpack.c.l.b16 %v250
    %v996 = vunpack.c.h.b16 %v250
    %v997 = vunpack.c.l.b16 %v251
    %v998 = vunpack.c.h.b16 %v251
    %v999 = vunpack.c.l.b16 %v252
    %v1000 = vunpack.c.h.b16 %v252
    %v1001 = vunpack.c.l.b16 %v253
    %v1002 = vunpack.c.h.b16 %v253
    %v1003 = vunpack.c.l.b16 %v254
    %v1004 = vunpack.c.h.b16 %v254
    %v1005 = vunpack.c.l.b16 %v255
    %v1006 = vunpack.c.h.b16 %v255
    %v1007 = vunpack.c.l.b16 %v256
    %v1008 = vunpack.c.h.b16 %v256
    %v1009 = vunpack.c.l.b16 %v257
    %v1010 = vunpack.c.h.b16 %v257
    %v1011 = vunpack.c.l.b16 %v258
    %v1012 = vunpack.c.h.b16 %v258
    %v1013 = vunpack.c.l.b16 %v259
    %v1014 = vunpack.c.h.b16 %v259
    %v1015 = vunpack.c.l.b16 %v260
    %v1016 = vunpack.c.h.b16 %v260
    %v1017 = vunpack.c.l.b16 %v261
    %v1018 = vunpack.c.h.b16 %v261
    %v1019 = vunpack.c.l.b16 %v262
    %v1020 = vunpack.c.h.b16 %v262
    %v1021 = vunpack.c.l.b16 %v263
    %v1022 = vunpack.c.h.b16 %v263
    %v1023 = vunpack.c.l.b16 %v264
    %v1024 = vunpack.c.h.b16 %v264
    %v1025 = vunpack.c.l.b16 %v265
    %v1026 = vunpack.c.h.b16 %v265
    %v1027 = vunpack.c.l.b16 %v266
    %v1028 = vunpack.c.h.b16 %v266
    %v1029 = vunpack.c.l.b16 %v267
    %v1030 = vunpack.c.h.b16 %v267
    %v1031 = vunpack.c.l.b16 %v268
    %v1032 = vunpack.c.h.b16 %v268
    %v1033 = vunpack.c.l.b16 %v269
    %v1034 = vunpack.c.h.b16 %v269
    %v1035 = vunpack.c.l.b16 %v270
    %v1036 = vunpack.c.h.b16 %v270
    %v1037 = vunpack.c.l.b16 %v271
    %v1038 = vunpack.c.h.b16 %v271
    %v1039 = vunpack.c.l.b16 %v272
    %v1040 = vunpack.c.h.b16 %v272
    %v1041 = vunpack.c.l.b16 %v273
    %v1042 = vunpack.c.h.b16 %v273
    %v1043 = vunpack.c.l.b16 %v274
    %v1044 = vunpack.c.h.b16 %v274
    %v1045 = vunpack.c.l.b16 %v275
    %v1046 = vunpack.c.h.b16 %v275
    %v1047 = vunpack.c.l.b16 %v276
    %v1048 = vunpack.c.h.b16 %v276
    %v1049 = vunpack.c.l.b16 %v277
    %v1050 = vunpack.c.h.b16 %v277
    %v1051 = vunpack.c.l.b16 %v278
    %v1052 = vunpack.c.h.b16 %v278
    %v1053 = vunpack.c.l.b16 %v279
    %v1054 = vunpack.c.h.b16 %v279
    %v1055 = vunpack.c.l.b16 %v280
    %v1056 = vunpack.c.h.b16 %v280
    %v1057 = vunpack.c.l.b16 %v281
    %v1058 = vunpack.c.h.b16 %v281
    %v1059 = vunpack.c.l.b16 %v282
    %v1060 = vunpack.c.h.b16 %v282
    %v1061 = vunpack.c.l.b16 %v283
    %v1062 = vunpack.c.h.b16 %v283
    %v1063 = vunpack.c.l.b16 %v284
    %v1064 = vunpack.c.h.b16 %v284
    %v1065 = vunpack.c.l.b16 %v285
    %v1066 = vunpack.c.h.b16 %v285
    %v1067 = vunpack.c.l.b16 %v286
    %v1068 = vunpack.c.h.b16 %v286
    %v1069 = vunpack.c.l.b16 %v287
    %v1070 = vunpack.c.h.b16 %v287
    %v1071 = vunpack.c.l.b16 %v288
    %v1072 = vunpack.c.h.b16 %v288
    %v1073 = vunpack.c.l.b16 %v289
    %v1074 = vunpack.c.h.b16 %v289
    %v1075 = vunpack.c.l.b16 %v290
    %v1076 = vunpack.c.h.b16 %v290
    %v1077 = vunpack.c.l.b16 %v291
    %v1078 = vunpack.c.h.b16 %v291
    %v1079 = vunpack.c.l.b16 %v292
    %v1080 = vunpack.c.h.b16 %v292
    %v1081 = vunpack.c.l.b16 %v293
    %v1082 = vunpack.c.h.b16 %v293
    %v1083 = vunpack.c.l.b16 %v294
    %v1084 = vunpack.c.h.b16 %v294
    %v1085 = vunpack.c.l.b16 %v295
    %v1086 = vunpack.c.h.b16 %v295
    %v1087 = vunpack.c.l.b16 %v296
    %v1088 = vunpack.c.h.b16 %v296
    %v1089 = vunpack.c.l.b16 %v297
    %v1090 = vunpack.c.h.b16 %v297
    %v1091 = vunpack.c.l.b16 %v298
    %v1092 = vunpack.c.h.b16 %v298
    %v1093 = vunpack.c.l.b16 %v299
    %v1094 = vunpack.c.h.b16 %v299
    %v1095 = vunpack.c.l.b16 %v300
    %v1096 = vunpack.c.h.b16 %v300
    %v1097 = vunpack.c.l.b16 %v301
    %v1098 = vunpack.c.h.b16 %v301
    %v1099 = vunpack.c.l.b16 %v302
    %v1100 = vunpack.c.h.b16 %v302
    %v1101 = vunpack.c.l.b16 %v303
    %v1102 = vunpack.c.h.b16 %v303
    %v1103 = vunpack.c.l.b16 %v304
    %v1104 = vunpack.c.h.b16 %v304
    %v1105 = vunpack.c.l.b16 %v305
    %v1106 = vunpack.c.h.b16 %v305
    %v1107 = vunpack.c.l.b16 %v306
    %v1108 = vunpack.c.h.b16 %v306
    %v1109 = vunpack.c.l.b16 %v307
    %v1110 = vunpack.c.h.b16 %v307
    %v1111 = vunpack.c.l.b16 %v308
    %v1112 = vunpack.c.h.b16 %v308
    %v1113 = vunpack.c.l.b16 %v309
    %v1114 = vunpack.c.h.b16 %v309
    %v1115 = vunpack.c.l.b16 %v310
    %v1116 = vunpack.c.h.b16 %v310
    %v1117 = vunpack.c.l.b16 %v311
    %v1118 = vunpack.c.h.b16 %v311
    %v1119 = vunpack.c.l.b16 %v312
    %v1120 = vunpack.c.h.b16 %v312
    %v1121 = vunpack.c.l.b16 %v313
    %v1122 = vunpack.c.h.b16 %v313
    %v1123 = vunpack.c.l.b16 %v314
    %v1124 = vunpack.c.h.b16 %v314
    %v1125 = vunpack.c.l.b16 %v315
    %v1126 = vunpack.c.h.b16 %v315
    %v1127 = vunpack.c.l.b16 %v316
    %v1128 = vunpack.c.h.b16 %v316
    %v1129 = vunpack.c.l.b16 %v317
    %v1130 = vunpack.c.h.b16 %v317
    %v1131 = vunpack.c.l.b16 %v318
    %v1132 = vunpack.c.h.b16 %v318
    %v1133 = vunpack.c.l.b16 %v319
    %v1134 = vunpack.c.h.b16 %v319
    %v1135 = vunpack.c.l.b16 %v320
    %v1136 = vunpack.c.h.b16 %v320
    %v1137 = vunpack.c.l.b16 %v321
    %v1138 = vunpack.c.h.b16 %v321
    %v1139 = vunpack.c.l.b16 %v322
    %v1140 = vunpack.c.h.b16 %v322
    %v1141 = vunpack.c.l.b16 %v323
    %v1142 = vunpack.c.h.b16 %v323
    %v1143 = vunpack.c.l.b16 %v324
    %v1144 = vunpack.c.h.b16 %v324
    %v1145 = vunpack.c.l.b16 %v325
    %v1146 = vunpack.c.h.b16 %v325
    %v1147 = vunpack.c.l.b16 %v326
    %v1148 = vunpack.c.h.b16 %v326
    %v1149 = vunpack.c.l.b16 %v327
    %v1150 = vunpack.c.h.b16 %v327
    %v1151 = vunpack.c.l.b16 %v328
    %v1152 = vunpack.c.h.b16 %v328
    %v1153 = vunpack.c.l.b16 %v329
    %v1154 = vunpack.c.h.b16 %v329
    %v1155 = vunpack.c.l.b16 %v330
    %v1156 = vunpack.c.h.b16 %v330
    %v1157 = vunpack.c.l.b16 %v331
    %v1158 = vunpack.c.h.b16 %v331
    %v1159 = vunpack.c.l.b16 %v332
    %v1160 = vunpack.c.h.b16 %v332
    %v1161 = vunpack.c.l.b16 %v333
    %v1162 = vunpack.c.h.b16 %v333
    %v1163 = vunpack.c.l.b16 %v334
    %v1164 = vunpack.c.h.b16 %v334
    %v1165 = vunpack.c.l.b16 %v335
    %v1166 = vunpack.c.h.b16 %v335
    %v1167 = vunpack.c.l.b16 %v336
    %v1168 = vunpack.c.h.b16 %v336
    %v1169 = vunpack.c.l.b16 %v337
    %v1170 = vunpack.c.h.b16 %v337
    %v1171 = vunpack.c.l.b16 %v338
    %v1172 = vunpack.c.h.b16 %v338
    %v1173 = vunpack.c.l.b16 %v339
    %v1174 = vunpack.c.h.b16 %v339
    %v1175 = vunpack.c.l.b16 %v340
    %v1176 = vunpack.c.h.b16 %v340
    %v1177 = vunpack.c.l.b16 %v341
    %v1178 = vunpack.c.h.b16 %v341
    %v1179 = vunpack.c.l.b16 %v342
    %v1180 = vunpack.c.h.b16 %v342
    %v1181 = vunpack.c.l.b16 %v343
    %v1182 = vunpack.c.h.b16 %v343
    %v1183 = vunpack.c.l.b16 %v344
    %v1184 = vunpack.c.h.b16 %v344
    %v1185 = vunpack.c.l.b16 %v345
    %v1186 = vunpack.c.h.b16 %v345
    %v1187 = vunpack.c.l.b16 %v346
    %v1188 = vunpack.c.h.b16 %v346
    %v1189 = vunpack.c.l.b16 %v347
    %v1190 = vunpack.c.h.b16 %v347
    %v1191 = vunpack.c.l.b16 %v348
    %v1192 = vunpack.c.h.b16 %v348
    %v1193 = vunpack.c.l.b16 %v349
    %v1194 = vunpack.c.h.b16 %v349
    %v1195 = vunpack.c.l.b16 %v350
    %v1196 = vunpack.c.h.b16 %v350
    %v1197 = vunpack.c.l.b16 %v351
    %v1198 = vunpack.c.h.b16 %v351
    %v1199 = vunpack.c.l.b16 %v352
    %v1200 = vunpack.c.h.b16 %v352
    %v1201 = vunpack.c.l.b16 %v353
    %v1202 = vunpack.c.h.b16 %v353
    %v1203 = vunpack.c.l.b16 %v354
    %v1204 = vunpack.c.h.b16 %v354
    %v1205 = vunpack.c.l.b16 %v355
    %v1206 = vunpack.c.h.b16 %v355
    %v1207 = vunpack.c.l.b16 %v356
    %v1208 = vunpack.c.h.b16 %v356
    %v1209 = vunpack.c.l.b16 %v357
    %v1210 = vunpack.c.h.b16 %v357
    %v1211 = vunpack.c.l.b16 %v358
    %v1212 = vunpack.c.h.b16 %v358
    %v1213 = vunpack.c.l.b16 %v359
    %v1214 = vunpack.c.h.b16 %v359
    %v1215 = vunpack.c.l.b16 %v360
    %v1216 = vunpack.c.h.b16 %v360
    %v1217 = vunpack.c.l.b16 %v361
    %v1218 = vunpack.c.h.b16 %v361
    %v1219 = vunpack.c.l.b16 %v362
    %v1220 = vunpack.c.h.b16 %v362
    %v1221 = vunpack.c.l.b16 %v363
    %v1222 = vunpack.c.h.b16 %v363
    %v1223 = vunpack.c.l.b16 %v364
    %v1224 = vunpack.c.h.b16 %v364
    %v1225 = vunpack.c.l.b16 %v365
    %v1226 = vunpack.c.h.b16 %v365
    %v1227 = vunpack.c.l.b16 %v366
    %v1228 = vunpack.c.h.b16 %v366
    %v1229 = vunpack.c.l.b16 %v367
    %v1230 = vunpack.c.h.b16 %v367
    %v1231 = vunpack.c.l.b16 %v368
    %v1232 = vunpack.c.h.b16 %v368
    %v1233 = vunpack.c.l.b16 %v369
    %v1234 = vunpack.c.h.b16 %v369
    %v1235 = vunpack.c.l.b16 %v370
    %v1236 = vunpack.c.h.b16 %v370
    %v1237 = vunpack.c.l.b16 %v371
    %v1238 = vunpack.c.h.b16 %v371
    %v1239 = vunpack.c.l.b16 %v372
    %v1240 = vunpack.c.h.b16 %v372
    %v1241 = vunpack.c.l.b16 %v373
    %v1242 = vunpack.c.h.b16 %v373
    %v1243 = vunpack.c.l.b16 %v374
    %v1244 = vunpack.c.h.b16 %v374
    %v1245 = vunpack.c.l.b16 %v375
    %v1246 = vunpack.c.h.b16 %v375
    %v1247 = vunpack.c.l.b16 %v376
    %v1248 = vunpack.c.h.b16 %v376
    %v1249 = vunpack.c.l.b16 %v377
    %v1250 = vunpack.c.h.b16 %v377
    %v1251 = vunpack.c.l.b16 %v378
    %v1252 = vunpack.c.h.b16 %v378
    %v1253 = vunpack.c.l.b16 %v379
    %v1254 = vunpack.c.h.b16 %v379
    %v1255 = vunpack.c.l.b16 %v380
    %v1256 = vunpack.c.h.b16 %v380
    %v1257 = vunpack.c.l.b16 %v381
    %v1258 = vunpack.c.h.b16 %v381
    %v1259 = vunpack.c.l.b16 %v382
    %v1260 = vunpack.c.h.b16 %v382
    %v1261 = vunpack.c.l.b16 %v383
    %v1262 = vunpack.c.h.b16 %v383
    %v1263 = vunpack.c.l.b16 %v384
    %v1264 = vunpack.c.h.b16 %v384
    %v1265 = vunpack.c.l.b16 %v385
    %v1266 = vunpack.c.h.b16 %v385
    %v1267 = vunpack.c.l.b16 %v386
    %v1268 = vunpack.c.h.b16 %v386
    %v1269 = vunpack.c.l.b16 %v387
    %v1270 = vunpack.c.h.b16 %v387
    %v1271 = vunpack.c.l.b16 %v388
    %v1272 = vunpack.c.h.b16 %v388
    %v1273 = vunpack.c.l.b16 %v389
    %v1274 = vunpack.c.h.b16 %v389
    %v1275 = vunpack.c.l.b16 %v390
    %v1276 = vunpack.c.h.b16 %v390
    %v1277 = vunpack.c.l.b16 %v391
    %v1278 = vunpack.c.h.b16 %v391
    %v1279 = vunpack.c.l.b16 %v392
    %v1280 = vunpack.c.h.b16 %v392
    %v1281 = vunpack.c.l.b16 %v393
    %v1282 = vunpack.c.h.b16 %v393
    %v1283 = vunpack.c.l.b16 %v394
    %v1284 = vunpack.c.h.b16 %v394
    %v1285 = vunpack.c.l.b16 %v395
    %v1286 = vunpack.c.h.b16 %v395
    %v1287 = vunpack.c.l.b16 %v396
    %v1288 = vunpack.c.h.b16 %v396
    %v1289 = vunpack.c.l.b16 %v397
    %v1290 = vunpack.c.h.b16 %v397
    %v1291 = vunpack.c.l.b16 %v398
    %v1292 = vunpack.c.h.b16 %v398
    %v1293 = vunpack.c.l.b16 %v399
    %v1294 = vunpack.c.h.b16 %v399
    %v1295 = vunpack.c.l.b16 %v400
    %v1296 = vunpack.c.h.b16 %v400
    %v1297 = vpack.c.b16 %v727, %v721
    %v1298 = vpack.c.b16 %v728, %v722
    %v1299 = vpack.c.b16 %v729, %v723
    %v1300 = vpack.c.b16 %v730, %v724
    %v1301 = vpack.c.b16 %v731, %v725
    %v1302 = vpack.c.b16 %v732, %v726
    %v1303 = vpack.c.b16 %v739, %v733
    %v1304 = vpack.c.b16 %v740, %v734
    %v1305 = vpack.c.b16 %v741, %v735
    %v1306 = vpack.c.b16 %v742, %v736
    %v1307 = vpack.c.b16 %v743, %v737
    %v1308 = vpack.c.b16 %v744, %v738
    %v1309 = vpack.c.b16 %v751, %v745
    %v1310 = vpack.c.b16 %v752, %v746
    %v1311 = vpack.c.b16 %v753, %v747
    %v1312 = vpack.c.b16 %v754, %v748
    %v1313 = vpack.c.b16 %v755, %v749
    %v1314 = vpack.c.b16 %v756, %v750
    %v1315 = vpack.c.b16 %v763, %v757
    %v1316 = vpack.c.b16 %v764, %v758
    %v1317 = vpack.c.b16 %v765, %v759
    %v1318 = vpack.c.b16 %v766, %v760
    %v1319 = vpack.c.b16 %v767, %v761
    %v1320 = vpack.c.b16 %v768, %v762
    %v1321 = vpack.c.b16 %v775, %v769
    %v1322 = vpack.c.b16 %v776, %v770
    %v1323 = vpack.c.b16 %v777, %v771
    %v1324 = vpack.c.b16 %v778, %v772
    %v1325 = vpack.c.b16 %v779, %v773
    %v1326 = vpack.c.b16 %v780, %v774
    %v1327 = vpack.c.b16 %v787, %v781
    %v1328 = vpack.c.b16 %v788, %v782
    %v1329 = vpack.c.b16 %v789, %v783
    %v1330 = vpack.c.b16 %v790, %v784
    %v1331 = vpack.c.b16 %v791, %v785
    %v1332 = vpack.c.b16 %v792, %v786
    %v1333 = vpack.c.b16 %v799, %v793
    %v1334 = vpack.c.b16 %v800, %v794
    %v1335 = vpack.c.b16 %v801, %v795
    %v1336 = vpack.c.b16 %v802, %v796
    %v1337 = vpack.c.b16 %v803, %v797
    %v1338 = vpack.c.b16 %v804, %v798
    %v1339 = vpack.c.b16 %v811, %v805
    %v1340 = vpack.c.b16 %v812, %v806
    %v1341 = vpack.c.b16 %v813, %v807
    %v1342 = vpack.c.b16 %v814, %v808
    %v1343 = vpack.c.b16 %v815, %v809
    %v1344 = vpack.c.b16 %v816, %v810
    %v1345 = vpack.c.b16 %v823, %v817
    %v1346 = vpack.c.b16 %v824, %v818
    %v1347 = vpack.c.b16 %v825, %v819
    %v1348 = vpack.c.b16 %v826, %v820
    %v1349 = vpack.c.b16 %v827, %v821
    %v1350 = vpack.c.b16 %v828, %v822
    %v1351 = vpack.c.b16 %v835, %v829
    %v1352 = vpack.c.b16 %v836, %v830
    %v1353 = vpack.c.b16 %v837, %v831
    %v1354 = vpack.c.b16 %v838, %v832
    %v1355 = vpack.c.b16 %v839, %v833
    %v1356 = vpack.c.b16 %v840, %v834
    %v1357 = vpack.c.b16 %v847, %v841
    %v1358 = vpack.c.b16 %v848, %v842
    %v1359 = vpack.c.b16 %v849, %v843
    %v1360 = vpack.c.b16 %v850, %v844
    %v1361 = vpack.c.b16 %v851, %v845
    %v1362 = vpack.c.b16 %v852, %v846
    %v1363 = vpack.c.b16 %v859, %v853
    %v1364 = vpack.c.b16 %v860, %v854
    %v1365 = vpack.c.b16 %v861, %v855
    %v1366 = vpack.c.b16 %v862, %v856
    %v1367 = vpack.c.b16 %v863, %v857
    %v1368 = vpack.c.b16 %v864, %v858
    %v1369 = vpack.c.b16 %v871, %v865
    %v1370 = vpack.c.b16 %v872, %v866
    %v1371 = vpack.c.b16 %v873, %v867
    %v1372 = vpack.c.b16 %v874, %v868
    %v1373 = vpack.c.b16 %v875, %v869
    %v1374 = vpack.c.b16 %v876, %v870
    %v1375 = vpack.c.b16 %v883, %v877
    %v1376 = vpack.c.b16 %v884, %v878
    %v1377 = vpack.c.b16 %v885, %v879
    %v1378 = vpack.c.b16 %v886, %v880
    %v1379 = vpack.c.b16 %v887, %v881
    %v1380 = vpack.c.b16 %v888, %v882
    %v1381 = vpack.c.b16 %v895, %v889
    %v1382 = vpack.c.b16 %v896, %v890
    %v1383 = vpack.c.b16 %v897, %v891
    %v1384 = vpack.c.b16 %v898, %v892
    %v1385 = vpack.c.b16 %v899, %v893
    %v1386 = vpack.c.b16 %v900, %v894
    %v1387 = vpack.c.b16 %v907, %v901
    %v1388 = vpack.c.b16 %v908, %v902
    %v1389 = vpack.c.b16 %v909, %v903
    %v1390 = vpack.c.b16 %v910, %v904
    %v1391 = vpack.c.b16 %v911, %v905
    %v1392 = vpack.c.b16 %v912, %v906
    %v1393 = vpack.c.b16 %v919, %v913
    %v1394 = vpack.c.b16 %v920, %v914
    %v1395 = vpack.c.b16 %v921, %v915
    %v1396 = vpack.c.b16 %v922, %v916
    %v1397 = vpack.c.b16 %v923, %v917
    %v1398 = vpack.c.b16 %v924, %v918
    %v1399 = vpack.c.b16 %v931, %v925
    %v1400 = vpack.c.b16 %v932, %v926
    %v1401 = vpack.c.b16 %v933, %v927
    %v1402 = vpack.c.b16 %v934, %v928
    %v1403 = vpack.c.b16 %v935, %v929
    %v1404 = vpack.c.b16 %v936, %v930
    %v1405 = vpack.c.b16 %v943, %v937
    %v1406 = vpack.c.b16 %v944, %v938
    %v1407 = vpack.c.b16 %v945, %v939
    %v1408 = vpack.c.b16 %v946, %v940
    %v1409 = vpack.c.b16 %v947, %v941
    %v1410 = vpack.c.b16 %v948, %v942
    %v1411 = vpack.c.b16 %v955, %v949
    %v1412 = vpack.c.b16 %v956, %v950
    %v1413 = vpack.c.b16 %v957, %v951
    %v1414 = vpack.c.b16 %v958, %v952
    %v1415 = vpack.c.b16 %v959, %v953
    %v1416 = vpack.c.b16 %v960, %v954
    %v1417 = vpack.c.b16 %v967, %v961
    %v1418 = vpack.c.b16 %v968, %v962
    %v1419 = vpack.c.b16 %v969, %v963
    %v1420 = vpack.c.b16 %v970, %v964
    %v1421 = vpack.c.b16 %v971, %v965
    %v1422 = vpack.c.b16 %v972, %v966
    %v1423 = vpack.c.b16 %v979, %v973
    %v1424 = vpack.c.b16 %v980, %v974
    %v1425 = vpack.c.b16 %v981, %v975
    %v1426 = vpack.c.b16 %v982, %v976
    %v1427 = vpack.c.b16 %v983, %v977
    %v1428 = vpack.c.b16 %v984, %v978
    %v1429 = vpack.c.b16 %v991, %v985
    %v1430 = vpack.c.b16 %v992, %v986
    %v1431 = vpack.c.b16 %v993, %v987
    %v1432 = vpack.c.b16 %v994, %v988
    %v1433 = vpack.c.b16 %v995, %v989
    %v1434 = vpack.c.b16 %v996, %v990
    %v1435 = vpack.c.b16 %v1003, %v997
    %v1436 = vpack.c.b16 %v1004, %v998
    %v1437 = vpack.c.b16 %v1005, %v999
    %v1438 = vpack.c.b16 %v1006, %v1000
    %v1439 = vpack.c.b16 %v1007, %v1001
    %v1440 = vpack.c.b16 %v1008, %v1002
    %v1441 = vpack.c.b16 %v1015, %v1009
    %v1442 = vpack.c.b16 %v1016, %v1010
    %v1443 = vpack.c.b16 %v1017, %v1011
    %v1444 = vpack.c.b16 %v1018, %v1012
    %v1445 = vpack.c.b16 %v1019, %v1013
    %v1446 = vpack.c.b16 %v1020, %v1014
    %v1447 = vpack.c.b16 %v1027, %v1021
    %v1448 = vpack.c.b16 %v1028, %v1022
    %v1449 = vpack.c.b16 %v1029, %v1023
    %v1450 = vpack.c.b16 %v1030, %v1024
    %v1451 = vpack.c.b16 %v1031, %v1025
    %v1452 = vpack.c.b16 %v1032, %v1026
    %v1453 = vpack.c.b16 %v1039, %v1033
    %v1454 = vpack.c.b16 %v1040, %v1034
    %v1455 = vpack.c.b16 %v1041, %v1035
    %v1456 = vpack.c.b16 %v1042, %v1036
    %v1457 = vpack.c.b16 %v1043, %v1037
    %v1458 = vpack.c.b16 %v1044, %v1038
    %v1459 = vpack.c.b16 %v1051, %v1045
    %v1460 = vpack.c.b16 %v1052, %v1046
    %v1461 = vpack.c.b16 %v1053, %v1047
    %v1462 = vpack.c.b16 %v1054, %v1048
    %v1463 = vpack.c.b16 %v1055, %v1049
    %v1464 = vpack.c.b16 %v1056, %v1050
    %v1465 = vpack.c.b16 %v1063, %v1057
    %v1466 = vpack.c.b16 %v1064, %v1058
    %v1467 = vpack.c.b16 %v1065, %v1059
    %v1468 = vpack.c.b16 %v1066, %v1060
    %v1469 = vpack.c.b16 %v1067, %v1061
    %v1470 = vpack.c.b16 %v1068, %v1062
    %v1471 = vpack.c.b16 %v1075, %v1069
    %v1472 = vpack.c.b16 %v1076, %v1070
    %v1473 = vpack.c.b16 %v1077, %v1071
    %v1474 = vpack.c.b16 %v1078, %v1072
    %v1475 = vpack.c.b16 %v1079, %v1073
    %v1476 = vpack.c.b16 %v1080, %v1074
    %v1477 = vpack.c.b16 %v1087, %v1081
    %v1478 = vpack.c.b16 %v1088, %v1082
    %v1479 = vpack.c.b16 %v1089, %v1083
    %v1480 = vpack.c.b16 %v1090, %v1084
    %v1481 = vpack.c.b16 %v1091, %v1085
    %v1482 = vpack.c.b16 %v1092, %v1086
    %v1483 = vpack.c.b16 %v1099, %v1093
    %v1484 = vpack.c.b16 %v1100, %v1094
    %v1485 = vpack.c.b16 %v1101, %v1095
    %v1486 = vpack.c.b16 %v1102, %v1096
    %v1487 = vpack.c.b16 %v1103, %v1097
    %v1488 = vpack.c.b16 %v1104, %v1098
    %v1489 = vpack.c.b16 %v1111, %v1105
    %v1490 = vpack.c.b16 %v1112, %v1106
    %v1491 = vpack.c.b16 %v1113, %v1107
    %v1492 = vpack.c.b16 %v1114, %v1108
    %v1493 = vpack.c.b16 %v1115, %v1109
    %v1494 = vpack.c.b16 %v1116, %v1110
    %v1495 = vpack.c.b16 %v1123, %v1117
    %v1496 = vpack.c.b16 %v1124, %v1118
    %v1497 = vpack.c.b16 %v1125, %v1119
    %v1498 = vpack.c.b16 %v1126, %v1120
    %v1499 = vpack.c.b16 %v1127, %v1121
    %v1500 = vpack.c.b16 %v1128, %v1122
    %v1501 = vpack.c.b16 %v1135, %v1129
    %v1502 = vpack.c.b16 %v1136, %v1130
    %v1503 = vpack.c.b16 %v1137, %v1131
    %v1504 = vpack.c.b16 %v1138, %v1132
    %v1505 = vpack.c.b16 %v1139, %v1133
    %v1506 = vpack.c.b16 %v1140, %v1134
    %v1507 = vpack.c.b16 %v1147, %v1141
    %v1508 = vpack.c.b16 %v1148, %v1142
    %v1509 = vpack.c.b16 %v1149, %v1143
    %v1510 = vpack.c.b16 %v1150, %v1144
    %v1511 = vpack.c.b16 %v1151, %v1145
    %v1512 = vpack.c.b16 %v1152, %v1146
    %v1513 = vpack.c.b16 %v1159, %v1153
    %v1514 = vpack.c.b16 %v1160, %v1154
    %v1515 = vpack.c.b16 %v1161, %v1155
    %v1516 = vpack.c.b16 %v1162, %v1156
    %v1517 = vpack.c.b16 %v1163, %v1157
    %v1518 = vpack.c.b16 %v1164, %v1158
    %v1519 = vpack.c.b16 %v1171, %v1165
    %v1520 = vpack.c.b16 %v1172, %v1166
    %v1521 = vpack.c.b16 %v1173, %v1167
    %v1522 = vpack.c.b16 %v1174, %v1168
    %v1523 = vpack.c.b16 %v1175, %v1169
    %v1524 = vpack.c.b16 %v1176, %v1170
    %v1525 = vpack.c.b16 %v1183, %v1177
    %v1526 = vpack.c.b16 %v1184, %v1178
    %v1527 = vpack.c.b16 %v1185, %v1179
    %v1528 = vpack.c.b16 %v1186, %v1180
    %v1529 = vpack.c.b16 %v1187, %v1181
    %v1530 = vpack.c.b16 %v1188, %v1182
    %v1531 = vpack.c.b16 %v1195, %v1189
    %v1532 = vpack.c.b16 %v1196, %v1190
    %v1533 = vpack.c.b16 %v1197, %v1191
    %v1534 = vpack.c.b16 %v1198, %v1192
    %v1535 = vpack.c.b16 %v1199, %v1193
    %v1536 = vpack.c.b16 %v1200, %v1194
    %v1537 = vpack.c.b16 %v1207, %v1201
    %v1538 = vpack.c.b16 %v1208, %v1202
    %v1539 = vpack.c.b16 %v1209, %v1203
    %v1540 = vpack.c.b16 %v1210, %v1204
    %v1541 = vpack.c.b16 %v1211, %v1205
    %v1542 = vpack.c.b16 %v1212, %v1206
    %v1543 = vpack.c.b16 %v1219, %v1213
    %v1544 = vpack.c.b16 %v1220, %v1214
    %v1545 = vpack.c.b16 %v1221, %v1215
    %v1546 = vpack.c.b16 %v1222, %v1216
    %v1547 = vpack.c.b16 %v1223, %v1217
    %v1548 = vpack.c.b16 %v1224, %v1218
    %v1549 = vpack.c.b16 %v1231, %v1225
    %v1550 = vpack.c.b16 %v1232, %v1226
    %v1551 = vpack.c.b16 %v1233, %v1227
    %v1552 = vpack.c.b16 %v1234, %v1228
    %v1553 = vpack.c.b16 %v1235, %v1229
    %v1554 = vpack.c.b16 %v1236, %v1230
    %v1555 = vpack.c.b16 %v1243, %v1237
    %v1556 = vpack.c.b16 %v1244, %v1238
    %v1557 = vpack.c.b16 %v1245, %v1239
    %v1558 = vpack.c.b16 %v1246, %v1240
    %v1559 = vpack.c.b16 %v1247, %v1241
    %v1560 = vpack.c.b16 %v1248, %v1242
    %v1561 = vpack.c.b16 %v1255, %v1249
    %v1562 = vpack.c.b16 %v1256, %v1250
    %v1563 = vpack.c.b16 %v1257, %v1251
    %v1564 = vpack.c.b16 %v1258, %v1252
    %v1565 = vpack.c.b16 %v1259, %v1253
    %v1566 = vpack.c.b16 %v1260, %v1254
    %v1567 = vpack.c.b16 %v1267, %v1261
    %v1568 = vpack.c.b16 %v1268, %v1262
    %v1569 = vpack.c.b16 %v1269, %v1263
    %v1570 = vpack.c.b16 %v1270, %v1264
    %v1571 = vpack.c.b16 %v1271, %v1265
    %v1572 = vpack.c.b16 %v1272, %v1266
    %v1573 = vpack.c.b16 %v1279, %v1273
    %v1574 = vpack.c.b16 %v1280, %v1274
    %v1575 = vpack.c.b16 %v1281, %v1275
    %v1576 = vpack.c.b16 %v1282, %v1276
    %v1577 = vpack.c.b16 %v1283, %v1277
    %v1578 = vpack.c.b16 %v1284, %v1278
    %v1579 = vpack.c.b16 %v1291, %v1285
    %v1580 = vpack.c.b16 %v1292, %v1286
    %v1581 = vpack.c.b16 %v1293, %v1287
    %v1582 = vpack.c.b16 %v1294, %v1288
    %v1583 = vpack.c.b16 %v1295, %v1289
    %v1584 = vpack.c.b16 %v1296, %v1290
    %1873 = vmatprep.subr.bf16.mxu0 %v1340
    %1874 = vmatpush1.bf16.msra.mxu0 %v1339
    %1875 = vmatprep.subr.bf16.mxu0 %v1334
    %1876 = vmatpush1.bf16.msra.mxu0 %v1333
    %1877 = vmatprep.subr.bf16.mxu0 %v1328
    %1878 = vmatpush1.bf16.msra.mxu0 %v1327
    %1879 = vmatprep.subr.bf16.mxu0 %v1322
    %1880 = vmatpush1.bf16.msra.mxu0 %v1321
    %1881 = vmatprep.subr.bf16.mxu0 %v1316
    %1882 = vmatpush1.bf16.msra.mxu0 %v1315
    %1883 = vmatprep.subr.bf16.mxu0 %v1310
    %1884 = vmatpush1.bf16.msra.mxu0 %v1309
    %1885 = vmatprep.subr.bf16.mxu0 %v1304
    %1886 = vmatpush1.bf16.msra.mxu0 %v1303
    %1887 = vmatprep.subr.bf16.mxu0 %v1298
    %1888 = vmatpush1.bf16.msra.mxu0 %v1297
    %1889 = vmatprep.subr.bf16.mxu0 %v1388
    %1890 = vmatpush2.bf16.msra.mxu0 %v1387
    %1891 = vmatprep.subr.bf16.mxu0 %v1382
    %1892 = vmatpush2.bf16.msra.mxu0 %v1381
    %1893 = vmatprep.subr.bf16.mxu0 %v1376
    %1894 = vmatpush2.bf16.msra.mxu0 %v1375
    %1895 = vmatprep.subr.bf16.mxu0 %v1370
    %1896 = vmatpush2.bf16.msra.mxu0 %v1369
    %1897 = vmatprep.subr.bf16.mxu0 %v1364
    %1898 = vmatpush2.bf16.msra.mxu0 %v1363
    %1899 = vmatprep.subr.bf16.mxu0 %v1358
    %1900 = vmatpush2.bf16.msra.mxu0 %v1357
    %1901 = vmatprep.subr.bf16.mxu0 %v1352
    %1902 = vmatpush2.bf16.msra.mxu0 %v1351
    %1903 = vmatprep.subr.bf16.mxu0 %v1346
    %1904 = vmatpush2.bf16.msra.mxu0 %v1345
    %1905 = vmatprep.mubr.bf16.mxu0 %v108
    %1906 = vmatmul.mubr.bf16.gmra.mxu0 %v107
    %v1907 = vpop.f32.mrf.mxu0
    %v1908 = vadd.f32 %v406, %v1907
    %v1909 = vpop.f32.mrf.mxu0
    %v1910 = vadd.f32 %v410, %v1909
    %v1911 = vpop.f32.mrf.mxu0
    %v1912 = vpop.f32.mrf.mxu0
    %1913 = vdwg.mxu0
    %1914 = vmatprep.subr.bf16.mxu0 %v1436
    %1915 = vmatpush1.bf16.msra.mxu0 %v1435
    %1916 = vmatprep.subr.bf16.mxu0 %v1430
    %1917 = vmatpush1.bf16.msra.mxu0 %v1429
    %1918 = vmatprep.subr.bf16.mxu0 %v1424
    %1919 = vmatpush1.bf16.msra.mxu0 %v1423
    %1920 = vmatprep.subr.bf16.mxu0 %v1418
    %1921 = vmatpush1.bf16.msra.mxu0 %v1417
    %1922 = vmatprep.subr.bf16.mxu0 %v1412
    %1923 = vmatpush1.bf16.msra.mxu0 %v1411
    %1924 = vmatprep.subr.bf16.mxu0 %v1406
    %1925 = vmatpush1.bf16.msra.mxu0 %v1405
    %1926 = vmatprep.subr.bf16.mxu0 %v1400
    %1927 = vmatpush1.bf16.msra.mxu0 %v1399
    %1928 = vmatprep.subr.bf16.mxu0 %v1394
    %1929 = vmatpush1.bf16.msra.mxu0 %v1393
    %1930 = vmatprep.subr.bf16.mxu0 %v1484
    %1931 = vmatpush2.bf16.msra.mxu0 %v1483
    %1932 = vmatprep.subr.bf16.mxu0 %v1478
    %1933 = vmatpush2.bf16.msra.mxu0 %v1477
    %1934 = vmatprep.subr.bf16.mxu0 %v1472
    %1935 = vmatpush2.bf16.msra.mxu0 %v1471
    %1936 = vmatprep.subr.bf16.mxu0 %v1466
    %1937 = vmatpush2.bf16.msra.mxu0 %v1465
    %1938 = vmatprep.subr.bf16.mxu0 %v1460
    %1939 = vmatpush2.bf16.msra.mxu0 %v1459
    %1940 = vmatprep.subr.bf16.mxu0 %v1454
    %1941 = vmatpush2.bf16.msra.mxu0 %v1453
    %1942 = vmatprep.subr.bf16.mxu0 %v1448
    %1943 = vmatpush2.bf16.msra.mxu0 %v1447
    %1944 = vmatprep.subr.bf16.mxu0 %v1442
    %1945 = vmatpush2.bf16.msra.mxu0 %v1441
    %1946 = vmatprep.mubr.bf16.mxu0 %v110
    %1947 = vmatmul.mubr.bf16.gmra.mxu0 %v109
    %v1948 = vpop.f32.mrf.mxu0
    %v1949 = vadd.f32 %v1908, %v1948
    %v1950 = vpop.f32.mrf.mxu0
    %v1951 = vadd.f32 %v1910, %v1950
    %v1952 = vpop.f32.mrf.mxu0
    %v1953 = vpop.f32.mrf.mxu0
    %1954 = vdwg.mxu0
    %1955 = vmatprep.subr.bf16.mxu0 %v1532
    %1956 = vmatpush1.bf16.msra.mxu0 %v1531
    %1957 = vmatprep.subr.bf16.mxu0 %v1526
    %1958 = vmatpush1.bf16.msra.mxu0 %v1525
    %1959 = vmatprep.subr.bf16.mxu0 %v1520
    %1960 = vmatpush1.bf16.msra.mxu0 %v1519
    %1961 = vmatprep.subr.bf16.mxu0 %v1514
    %1962 = vmatpush1.bf16.msra.mxu0 %v1513
    %1963 = vmatprep.subr.bf16.mxu0 %v1508
    %1964 = vmatpush1.bf16.msra.mxu0 %v1507
    %1965 = vmatprep.subr.bf16.mxu0 %v1502
    %1966 = vmatpush1.bf16.msra.mxu0 %v1501
    %1967 = vmatprep.subr.bf16.mxu0 %v1496
    %1968 = vmatpush1.bf16.msra.mxu0 %v1495
    %1969 = vmatprep.subr.bf16.mxu0 %v1490
    %1970 = vmatpush1.bf16.msra.mxu0 %v1489
    %1971 = vmatprep.subr.bf16.mxu0 %v1580
    %1972 = vmatpush2.bf16.msra.mxu0 %v1579
    %1973 = vmatprep.subr.bf16.mxu0 %v1574
    %1974 = vmatpush2.bf16.msra.mxu0 %v1573
    %1975 = vmatprep.subr.bf16.mxu0 %v1568
    %1976 = vmatpush2.bf16.msra.mxu0 %v1567
    %1977 = vmatprep.subr.bf16.mxu0 %v1562
    %1978 = vmatpush2.bf16.msra.mxu0 %v1561
    %1979 = vmatprep.subr.bf16.mxu0 %v1556
    %1980 = vmatpush2.bf16.msra.mxu0 %v1555
    %1981 = vmatprep.subr.bf16.mxu0 %v1550
    %1982 = vmatpush2.bf16.msra.mxu0 %v1549
    %1983 = vmatprep.subr.bf16.mxu0 %v1544
    %1984 = vmatpush2.bf16.msra.mxu0 %v1543
    %1985 = vmatprep.subr.bf16.mxu0 %v1538
    %1986 = vmatpush2.bf16.msra.mxu0 %v1537
    %1987 = vmatprep.mubr.bf16.mxu0 %v112
    %1988 = vmatmul.mubr.bf16.gmra.mxu0 %v111
    %v1989 = vpop.f32.mrf.mxu0
    %v1990 = vadd.f32 %v1949, %v1989
    %v1991 = vpop.f32.mrf.mxu0
    %v1992 = vadd.f32 %v1951, %v1991
    %v1993 = vpop.f32.mrf.mxu0
    %v1994 = vpop.f32.mrf.mxu0
    %1995 = vdwg.mxu0
    %1996 = vmatprep.subr.bf16.mxu0 %v1342
    %1997 = vmatpush1.bf16.msra.mxu0 %v1341
    %1998 = vmatprep.subr.bf16.mxu0 %v1336
    %1999 = vmatpush1.bf16.msra.mxu0 %v1335
    %2000 = vmatprep.subr.bf16.mxu0 %v1330
    %2001 = vmatpush1.bf16.msra.mxu0 %v1329
    %2002 = vmatprep.subr.bf16.mxu0 %v1324
    %2003 = vmatpush1.bf16.msra.mxu0 %v1323
    %2004 = vmatprep.subr.bf16.mxu0 %v1318
    %2005 = vmatpush1.bf16.msra.mxu0 %v1317
    %2006 = vmatprep.subr.bf16.mxu0 %v1312
    %2007 = vmatpush1.bf16.msra.mxu0 %v1311
    %2008 = vmatprep.subr.bf16.mxu0 %v1306
    %2009 = vmatpush1.bf16.msra.mxu0 %v1305
    %2010 = vmatprep.subr.bf16.mxu0 %v1300
    %2011 = vmatpush1.bf16.msra.mxu0 %v1299
    %2012 = vmatprep.subr.bf16.mxu0 %v1390
    %2013 = vmatpush2.bf16.msra.mxu0 %v1389
    %2014 = vmatprep.subr.bf16.mxu0 %v1384
    %2015 = vmatpush2.bf16.msra.mxu0 %v1383
    %2016 = vmatprep.subr.bf16.mxu0 %v1378
    %2017 = vmatpush2.bf16.msra.mxu0 %v1377
    %2018 = vmatprep.subr.bf16.mxu0 %v1372
    %2019 = vmatpush2.bf16.msra.mxu0 %v1371
    %2020 = vmatprep.subr.bf16.mxu0 %v1366
    %2021 = vmatpush2.bf16.msra.mxu0 %v1365
    %2022 = vmatprep.subr.bf16.mxu0 %v1360
    %2023 = vmatpush2.bf16.msra.mxu0 %v1359
    %2024 = vmatprep.subr.bf16.mxu0 %v1354
    %2025 = vmatpush2.bf16.msra.mxu0 %v1353
    %2026 = vmatprep.subr.bf16.mxu0 %v1348
    %2027 = vmatpush2.bf16.msra.mxu0 %v1347
    %2028 = vmatprep.mubr.bf16.mxu0 %v108
    %2029 = vmatmul.mubr.bf16.gmra.mxu0 %v107
    %v2030 = vpop.f32.mrf.mxu0
    %v2031 = vadd.f32 %v414, %v2030
    %v2032 = vpop.f32.mrf.mxu0
    %v2033 = vadd.f32 %v418, %v2032
    %v2034 = vpop.f32.mrf.mxu0
    %v2035 = vpop.f32.mrf.mxu0
    %2036 = vdwg.mxu0
    %2037 = vmatprep.subr.bf16.mxu0 %v1438
    %2038 = vmatpush1.bf16.msra.mxu0 %v1437
    %2039 = vmatprep.subr.bf16.mxu0 %v1432
    %2040 = vmatpush1.bf16.msra.mxu0 %v1431
    %2041 = vmatprep.subr.bf16.mxu0 %v1426
    %2042 = vmatpush1.bf16.msra.mxu0 %v1425
    %2043 = vmatprep.subr.bf16.mxu0 %v1420
    %2044 = vmatpush1.bf16.msra.mxu0 %v1419
    %2045 = vmatprep.subr.bf16.mxu0 %v1414
    %2046 = vmatpush1.bf16.msra.mxu0 %v1413
    %2047 = vmatprep.subr.bf16.mxu0 %v1408
    %2048 = vmatpush1.bf16.msra.mxu0 %v1407
    %2049 = vmatprep.subr.bf16.mxu0 %v1402
    %2050 = vmatpush1.bf16.msra.mxu0 %v1401
    %2051 = vmatprep.subr.bf16.mxu0 %v1396
    %2052 = vmatpush1.bf16.msra.mxu0 %v1395
    %2053 = vmatprep.subr.bf16.mxu0 %v1486
    %2054 = vmatpush2.bf16.msra.mxu0 %v1485
    %2055 = vmatprep.subr.bf16.mxu0 %v1480
    %2056 = vmatpush2.bf16.msra.mxu0 %v1479
    %2057 = vmatprep.subr.bf16.mxu0 %v1474
    %2058 = vmatpush2.bf16.msra.mxu0 %v1473
    %2059 = vmatprep.subr.bf16.mxu0 %v1468
    %2060 = vmatpush2.bf16.msra.mxu0 %v1467
    %2061 = vmatprep.subr.bf16.mxu0 %v1462
    %2062 = vmatpush2.bf16.msra.mxu0 %v1461
    %2063 = vmatprep.subr.bf16.mxu0 %v1456
    %2064 = vmatpush2.bf16.msra.mxu0 %v1455
    %2065 = vmatprep.subr.bf16.mxu0 %v1450
    %2066 = vmatpush2.bf16.msra.mxu0 %v1449
    %2067 = vmatprep.subr.bf16.mxu0 %v1444
    %2068 = vmatpush2.bf16.msra.mxu0 %v1443
    %2069 = vmatprep.mubr.bf16.mxu0 %v110
    %2070 = vmatmul.mubr.bf16.gmra.mxu0 %v109
    %v2071 = vpop.f32.mrf.mxu0
    %v2072 = vadd.f32 %v2031, %v2071
    %v2073 = vpop.f32.mrf.mxu0
    %v2074 = vadd.f32 %v2033, %v2073
    %v2075 = vpop.f32.mrf.mxu0
    %v2076 = vpop.f32.mrf.mxu0
    %2077 = vdwg.mxu0
    %2078 = vmatprep.subr.bf16.mxu0 %v1534
    %2079 = vmatpush1.bf16.msra.mxu0 %v1533
    %2080 = vmatprep.subr.bf16.mxu0 %v1528
    %2081 = vmatpush1.bf16.msra.mxu0 %v1527
    %2082 = vmatprep.subr.bf16.mxu0 %v1522
    %2083 = vmatpush1.bf16.msra.mxu0 %v1521
    %2084 = vmatprep.subr.bf16.mxu0 %v1516
    %2085 = vmatpush1.bf16.msra.mxu0 %v1515
    %2086 = vmatprep.subr.bf16.mxu0 %v1510
    %2087 = vmatpush1.bf16.msra.mxu0 %v1509
    %2088 = vmatprep.subr.bf16.mxu0 %v1504
    %2089 = vmatpush1.bf16.msra.mxu0 %v1503
    %2090 = vmatprep.subr.bf16.mxu0 %v1498
    %2091 = vmatpush1.bf16.msra.mxu0 %v1497
    %2092 = vmatprep.subr.bf16.mxu0 %v1492
    %2093 = vmatpush1.bf16.msra.mxu0 %v1491
    %2094 = vmatprep.subr.bf16.mxu0 %v1582
    %2095 = vmatpush2.bf16.msra.mxu0 %v1581
    %2096 = vmatprep.subr.bf16.mxu0 %v1576
    %2097 = vmatpush2.bf16.msra.mxu0 %v1575
    %2098 = vmatprep.subr.bf16.mxu0 %v1570
    %2099 = vmatpush2.bf16.msra.mxu0 %v1569
    %2100 = vmatprep.subr.bf16.mxu0 %v1564
    %2101 = vmatpush2.bf16.msra.mxu0 %v1563
    %2102 = vmatprep.subr.bf16.mxu0 %v1558
    %2103 = vmatpush2.bf16.msra.mxu0 %v1557
    %2104 = vmatprep.subr.bf16.mxu0 %v1552
    %2105 = vmatpush2.bf16.msra.mxu0 %v1551
    %2106 = vmatprep.subr.bf16.mxu0 %v1546
    %2107 = vmatpush2.bf16.msra.mxu0 %v1545
    %2108 = vmatprep.subr.bf16.mxu0 %v1540
    %2109 = vmatpush2.bf16.msra.mxu0 %v1539
    %2110 = vmatprep.mubr.bf16.mxu0 %v112
    %2111 = vmatmul.mubr.bf16.gmra.mxu0 %v111
    %v2112 = vpop.f32.mrf.mxu0
    %v2113 = vadd.f32 %v2072, %v2112
    %v2114 = vpop.f32.mrf.mxu0
    %v2115 = vadd.f32 %v2074, %v2114
    %v2116 = vpop.f32.mrf.mxu0
    %v2117 = vpop.f32.mrf.mxu0
    %2118 = vdwg.mxu0
    %2119 = vmatprep.subr.bf16.mxu0 %v1344
    %2120 = vmatpush1.bf16.msra.mxu0 %v1343
    %2121 = vmatprep.subr.bf16.mxu0 %v1338
    %2122 = vmatpush1.bf16.msra.mxu0 %v1337
    %2123 = vmatprep.subr.bf16.mxu0 %v1332
    %2124 = vmatpush1.bf16.msra.mxu0 %v1331
    %2125 = vmatprep.subr.bf16.mxu0 %v1326
    %2126 = vmatpush1.bf16.msra.mxu0 %v1325
    %2127 = vmatprep.subr.bf16.mxu0 %v1320
    %2128 = vmatpush1.bf16.msra.mxu0 %v1319
    %2129 = vmatprep.subr.bf16.mxu0 %v1314
    %2130 = vmatpush1.bf16.msra.mxu0 %v1313
    %2131 = vmatprep.subr.bf16.mxu0 %v1308
    %2132 = vmatpush1.bf16.msra.mxu0 %v1307
    %2133 = vmatprep.subr.bf16.mxu0 %v1302
    %2134 = vmatpush1.bf16.msra.mxu0 %v1301
    %2135 = vmatprep.subr.bf16.mxu0 %v1392
    %2136 = vmatpush2.bf16.msra.mxu0 %v1391
    %2137 = vmatprep.subr.bf16.mxu0 %v1386
    %2138 = vmatpush2.bf16.msra.mxu0 %v1385
    %2139 = vmatprep.subr.bf16.mxu0 %v1380
    %2140 = vmatpush2.bf16.msra.mxu0 %v1379
    %2141 = vmatprep.subr.bf16.mxu0 %v1374
    %2142 = vmatpush2.bf16.msra.mxu0 %v1373
    %2143 = vmatprep.subr.bf16.mxu0 %v1368
    %2144 = vmatpush2.bf16.msra.mxu0 %v1367
    %2145 = vmatprep.subr.bf16.mxu0 %v1362
    %2146 = vmatpush2.bf16.msra.mxu0 %v1361
    %2147 = vmatprep.subr.bf16.mxu0 %v1356
    %2148 = vmatpush2.bf16.msra.mxu0 %v1355
    %2149 = vmatprep.subr.bf16.mxu0 %v1350
    %2150 = vmatpush2.bf16.msra.mxu0 %v1349
    %2151 = vmatprep.mubr.bf16.mxu0 %v108
    %2152 = vmatmul.mubr.bf16.gmra.mxu0 %v107
    %v2153 = vpop.f32.mrf.mxu0
    %v2154 = vadd.f32 %v422, %v2153
    %v2155 = vpop.f32.mrf.mxu0
    %v2156 = vadd.f32 %v426, %v2155
    %v2157 = vpop.f32.mrf.mxu0
    %v2158 = vpop.f32.mrf.mxu0
    %2159 = vdwg.mxu0
    %2160 = vmatprep.subr.bf16.mxu0 %v1440
    %2161 = vmatpush1.bf16.msra.mxu0 %v1439
    %2162 = vmatprep.subr.bf16.mxu0 %v1434
    %2163 = vmatpush1.bf16.msra.mxu0 %v1433
    %2164 = vmatprep.subr.bf16.mxu0 %v1428
    %2165 = vmatpush1.bf16.msra.mxu0 %v1427
    %2166 = vmatprep.subr.bf16.mxu0 %v1422
    %2167 = vmatpush1.bf16.msra.mxu0 %v1421
    %2168 = vmatprep.subr.bf16.mxu0 %v1416
    %2169 = vmatpush1.bf16.msra.mxu0 %v1415
    %2170 = vmatprep.subr.bf16.mxu0 %v1410
    %2171 = vmatpush1.bf16.msra.mxu0 %v1409
    %2172 = vmatprep.subr.bf16.mxu0 %v1404
    %2173 = vmatpush1.bf16.msra.mxu0 %v1403
    %2174 = vmatprep.subr.bf16.mxu0 %v1398
    %2175 = vmatpush1.bf16.msra.mxu0 %v1397
    %2176 = vmatprep.subr.bf16.mxu0 %v1488
    %2177 = vmatpush2.bf16.msra.mxu0 %v1487
    %2178 = vmatprep.subr.bf16.mxu0 %v1482
    %2179 = vmatpush2.bf16.msra.mxu0 %v1481
    %2180 = vmatprep.subr.bf16.mxu0 %v1476
    %2181 = vmatpush2.bf16.msra.mxu0 %v1475
    %2182 = vmatprep.subr.bf16.mxu0 %v1470
    %2183 = vmatpush2.bf16.msra.mxu0 %v1469
    %2184 = vmatprep.subr.bf16.mxu0 %v1464
    %2185 = vmatpush2.bf16.msra.mxu0 %v1463
    %2186 = vmatprep.subr.bf16.mxu0 %v1458
    %2187 = vmatpush2.bf16.msra.mxu0 %v1457
    %2188 = vmatprep.subr.bf16.mxu0 %v1452
    %2189 = vmatpush2.bf16.msra.mxu0 %v1451
    %2190 = vmatprep.subr.bf16.mxu0 %v1446
    %2191 = vmatpush2.bf16.msra.mxu0 %v1445
    %2192 = vmatprep.mubr.bf16.mxu0 %v110
    %2193 = vmatmul.mubr.bf16.gmra.mxu0 %v109
    %v2194 = vpop.f32.mrf.mxu0
    %v2195 = vadd.f32 %v2154, %v2194
    %v2196 = vpop.f32.mrf.mxu0
    %v2197 = vadd.f32 %v2156, %v2196
    %v2198 = vpop.f32.mrf.mxu0
    %v2199 = vpop.f32.mrf.mxu0
    %2200 = vdwg.mxu0
    %2201 = vmatprep.subr.bf16.mxu0 %v1536
    %2202 = vmatpush1.bf16.msra.mxu0 %v1535
    %2203 = vmatprep.subr.bf16.mxu0 %v1530
    %2204 = vmatpush1.bf16.msra.mxu0 %v1529
    %2205 = vmatprep.subr.bf16.mxu0 %v1524
    %2206 = vmatpush1.bf16.msra.mxu0 %v1523
    %2207 = vmatprep.subr.bf16.mxu0 %v1518
    %2208 = vmatpush1.bf16.msra.mxu0 %v1517
    %2209 = vmatprep.subr.bf16.mxu0 %v1512
    %2210 = vmatpush1.bf16.msra.mxu0 %v1511
    %2211 = vmatprep.subr.bf16.mxu0 %v1506
    %2212 = vmatpush1.bf16.msra.mxu0 %v1505
    %2213 = vmatprep.subr.bf16.mxu0 %v1500
    %2214 = vmatpush1.bf16.msra.mxu0 %v1499
    %2215 = vmatprep.subr.bf16.mxu0 %v1494
    %2216 = vmatpush1.bf16.msra.mxu0 %v1493
    %2217 = vmatprep.subr.bf16.mxu0 %v1584
    %2218 = vmatpush2.bf16.msra.mxu0 %v1583
    %2219 = vmatprep.subr.bf16.mxu0 %v1578
    %2220 = vmatpush2.bf16.msra.mxu0 %v1577
    %2221 = vmatprep.subr.bf16.mxu0 %v1572
    %2222 = vmatpush2.bf16.msra.mxu0 %v1571
    %2223 = vmatprep.subr.bf16.mxu0 %v1566
    %2224 = vmatpush2.bf16.msra.mxu0 %v1565
    %2225 = vmatprep.subr.bf16.mxu0 %v1560
    %2226 = vmatpush2.bf16.msra.mxu0 %v1559
    %2227 = vmatprep.subr.bf16.mxu0 %v1554
    %2228 = vmatpush2.bf16.msra.mxu0 %v1553
    %2229 = vmatprep.subr.bf16.mxu0 %v1548
    %2230 = vmatpush2.bf16.msra.mxu0 %v1547
    %2231 = vmatprep.subr.bf16.mxu0 %v1542
    %2232 = vmatpush2.bf16.msra.mxu0 %v1541
    %2233 = vmatprep.mubr.bf16.mxu0 %v112
    %2234 = vmatmul.mubr.bf16.gmra.mxu0 %v111
    %v2235 = vpop.f32.mrf.mxu0
    %v2236 = vadd.f32 %v2195, %v2235
    %v2237 = vpop.f32.mrf.mxu0
    %v2238 = vadd.f32 %v2197, %v2237
    %v2239 = vpop.f32.mrf.mxu0
    %v2240 = vpop.f32.mrf.mxu0
    %2241 = vdwg.mxu0
    %v2242 = vpack.c.bf16 %v1990, %v1990
    %v2243 = vpack.c.bf16 %v1992, %v1992
    %v2244 = vpack.c.bf16 %v2113, %v2113
    %v2245 = vpack.c.bf16 %v2115, %v2115
    %v2246 = vpack.c.bf16 %v2236, %v2236
    %v2247 = vpack.c.bf16 %v2238, %v2238
    %v2254 = vunpack.c.l.b16 %v2242
    %v2255 = vunpack.c.l.b16 %v2243
    %v2256 = vunpack.c.l.b16 %v2244
    %v2257 = vunpack.c.l.b16 %v2245
    %v2258 = vunpack.c.l.b16 %v2246
    %v2259 = vunpack.c.l.b16 %v2247
    %v2260 = vpack.c.b16 %v2255, %v2254
    %v2261 = vpack.c.b16 %v2257, %v2256
    %v2262 = vpack.c.b16 %v2259, %v2258
    %2266 = vst [vmem:[#allocation13] sm:$0xff] %v2260
    %2267 = vst [vmem:[#allocation13 + $0x8] sm:$0xff] %v2261
    %2268 = vst [vmem:[#allocation13 + $0x10] sm:$0xff] %v2262
    %v2269 = vld [vmem:[#allocation8] sm:$0xff]
    %v2270 = vld [vmem:[#allocation8 + $0x8] sm:$0xff]
    %v2271 = vld [vmem:[#allocation8 + $0x10] sm:$0xff]
    %v2272 = vld [vmem:[#allocation8 + $0x18] sm:$0xff]
    %v2273 = vld [vmem:[#allocation8 + $0x20] sm:$0xff]
    %v2274 = vld [vmem:[#allocation8 + $0x28] sm:$0xff]
    %v2275 = vld [vmem:[#allocation8 + $0x30] sm:$0xff]
    %v2276 = vld [vmem:[#allocation8 + $0x38] sm:$0xff]
    %v2277 = vld [vmem:[#allocation8 + $0x40] sm:$0xff]
    %v2278 = vld [vmem:[#allocation8 + $0x48] sm:$0xff]
    %v2279 = vld [vmem:[#allocation8 + $0x50] sm:$0xff]
    %v2280 = vld [vmem:[#allocation8 + $0x58] sm:$0xff]
    %v2281 = vld [vmem:[#allocation10] sm:$0x3f]
    %v2282 = vld [vmem:[#allocation11] sm:$0x3f]
    %v2283 = vadd.f32 %v2269, %v2270
    %v2284 = vadd.f32 %v2283, %v2271
    %v2285 = vadd.f32 %v2284, %v2272
    %v2286 = vadd.f32 %v2285, %v2273
    %v2287 = vadd.f32 %v2286, %v2274
    %2288 = vadd.xlane.f32.xlu0 %v2287
    %v2289 = vpop.xlane.xlu0 %2288
    %v2290 = vadd.f32 %v2275, %v2276
    %v2291 = vadd.f32 %v2290, %v2277
    %v2292 = vadd.f32 %v2291, %v2278
    %v2293 = vadd.f32 %v2292, %v2279
    %v2294 = vadd.f32 %v2293, %v2280
    %2295 = vadd.xlane.f32.xlu0 %v2294
    %v2296 = vpop.xlane.xlu0 %2295
    %v2297 = vrcp.pop 768.0
    %v2298 = vmul.f32 %v2289, %v2297
    %v2299 = vmul.f32 %v2296, %v2297
    %v2300 = vsub.f32 %v2269, %v2298
    %v2301 = vsub.f32 %v2270, %v2298
    %v2302 = vsub.f32 %v2271, %v2298
    %v2303 = vsub.f32 %v2272, %v2298
    %v2304 = vsub.f32 %v2273, %v2298
    %v2305 = vsub.f32 %v2274, %v2298
    %v2306 = vsub.f32 %v2275, %v2299
    %v2307 = vsub.f32 %v2276, %v2299
    %v2308 = vsub.f32 %v2277, %v2299
    %v2309 = vsub.f32 %v2278, %v2299
    %v2310 = vsub.f32 %v2279, %v2299
    %v2311 = vsub.f32 %v2280, %v2299
    %v2312 = vmul.f32 %v2300, %v2300
    %v2313 = vmul.f32 %v2301, %v2301
    %v2314 = vmul.f32 %v2302, %v2302
    %v2315 = vmul.f32 %v2303, %v2303
    %v2316 = vmul.f32 %v2304, %v2304
    %v2317 = vmul.f32 %v2305, %v2305
    %v2318 = vmul.f32 %v2306, %v2306
    %v2319 = vmul.f32 %v2307, %v2307
    %v2320 = vmul.f32 %v2308, %v2308
    %v2321 = vmul.f32 %v2309, %v2309
    %v2322 = vmul.f32 %v2310, %v2310
    %v2323 = vmul.f32 %v2311, %v2311
    %v2324 = vadd.f32 %v2312, %v2313
    %v2325 = vadd.f32 %v2324, %v2314
    %v2326 = vadd.f32 %v2325, %v2315
    %v2327 = vadd.f32 %v2326, %v2316
    %v2328 = vadd.f32 %v2327, %v2317
    %2329 = vadd.xlane.f32.xlu0 %v2328
    %v2330 = vpop.xlane.xlu0 %2329
    %v2331 = vadd.f32 %v2318, %v2319
    %v2332 = vadd.f32 %v2331, %v2320
    %v2333 = vadd.f32 %v2332, %v2321
    %v2334 = vadd.f32 %v2333, %v2322
    %v2335 = vadd.f32 %v2334, %v2323
    %2336 = vadd.xlane.f32.xlu0 %v2335
    %v2337 = vpop.xlane.xlu0 %2336
    %v2338 = vmul.f32 %v2330, %v2297
    %v2339 = vmul.f32 %v2337, %v2297
    %v2340 = vadd.f32 %v2338, 1e-12
    %v2341 = vadd.f32 %v2339, 1e-12
    %v2342 = vrsqrt.pop %v2340
    %v2343 = vrsqrt.pop %v2341
    %v2344 = vmul.f32 %v2300, %v2342
    %v2345 = vmul.f32 %v2301, %v2342
    %v2346 = vmul.f32 %v2302, %v2342
    %v2347 = vmul.f32 %v2303, %v2342
    %v2348 = vmul.f32 %v2304, %v2342
    %v2349 = vmul.f32 %v2305, %v2342
    %v2350 = vmul.f32 %v2306, %v2343
    %v2351 = vmul.f32 %v2307, %v2343
    %v2352 = vmul.f32 %v2308, %v2343
    %v2353 = vmul.f32 %v2309, %v2343
    %v2354 = vmul.f32 %v2310, %v2343
    %v2355 = vmul.f32 %v2311, %v2343
    %v2357 = vlaneseq
    %v2358 = vshrl.u32 %v2357, 7
    %v2359 = vsub.s32 0, %v2358
    %v2360 = vrot.slane %v2281, %v2359
    %v2361 = vlaneseq
    %v2362 = vshrl.u32 %v2361, 7
    %v2363 = vsub.s32 1, %v2362
    %v2364 = vrot.slane %v2281, %v2363
    %v2365 = vlaneseq
    %v2366 = vshrl.u32 %v2365, 7
    %v2367 = vsub.s32 2, %v2366
    %v2368 = vrot.slane %v2281, %v2367
    %v2369 = vlaneseq
    %v2370 = vshrl.u32 %v2369, 7
    %v2371 = vsub.s32 3, %v2370
    %v2372 = vrot.slane %v2281, %v2371
    %v2373 = vlaneseq
    %v2374 = vshrl.u32 %v2373, 7
    %v2375 = vsub.s32 4, %v2374
    %v2376 = vrot.slane %v2281, %v2375
    %v2377 = vlaneseq
    %v2378 = vshrl.u32 %v2377, 7
    %v2379 = vsub.s32 5, %v2378
    %v2380 = vrot.slane %v2281, %v2379
    %v2387 = vmul.f32 %v2344, %v2360
    %v2388 = vmul.f32 %v2345, %v2364
    %v2389 = vmul.f32 %v2346, %v2368
    %v2390 = vmul.f32 %v2347, %v2372
    %v2391 = vmul.f32 %v2348, %v2376
    %v2392 = vmul.f32 %v2349, %v2380
    %v2393 = vmul.f32 %v2350, %v2360
    %v2394 = vmul.f32 %v2351, %v2364
    %v2395 = vmul.f32 %v2352, %v2368
    %v2396 = vmul.f32 %v2353, %v2372
    %v2397 = vmul.f32 %v2354, %v2376
    %v2398 = vmul.f32 %v2355, %v2380
    %v2400 = vlaneseq
    %v2401 = vshrl.u32 %v2400, 7
    %v2402 = vsub.s32 0, %v2401
    %v2403 = vrot.slane %v2282, %v2402
    %v2404 = vlaneseq
    %v2405 = vshrl.u32 %v2404, 7
    %v2406 = vsub.s32 1, %v2405
    %v2407 = vrot.slane %v2282, %v2406
    %v2408 = vlaneseq
    %v2409 = vshrl.u32 %v2408, 7
    %v2410 = vsub.s32 2, %v2409
    %v2411 = vrot.slane %v2282, %v2410
    %v2412 = vlaneseq
    %v2413 = vshrl.u32 %v2412, 7
    %v2414 = vsub.s32 3, %v2413
    %v2415 = vrot.slane %v2282, %v2414
    %v2416 = vlaneseq
    %v2417 = vshrl.u32 %v2416, 7
    %v2418 = vsub.s32 4, %v2417
    %v2419 = vrot.slane %v2282, %v2418
    %v2420 = vlaneseq
    %v2421 = vshrl.u32 %v2420, 7
    %v2422 = vsub.s32 5, %v2421
    %v2423 = vrot.slane %v2282, %v2422
    %v2430 = vadd.f32 %v2387, %v2403
    %v2431 = vadd.f32 %v2388, %v2407
    %v2432 = vadd.f32 %v2389, %v2411
    %v2433 = vadd.f32 %v2390, %v2415
    %v2434 = vadd.f32 %v2391, %v2419
    %v2435 = vadd.f32 %v2392, %v2423
    %v2436 = vadd.f32 %v2393, %v2403
    %v2437 = vadd.f32 %v2394, %v2407
    %v2438 = vadd.f32 %v2395, %v2411
    %v2439 = vadd.f32 %v2396, %v2415
    %v2440 = vadd.f32 %v2397, %v2419
    %v2441 = vadd.f32 %v2398, %v2423
    %v2442 = vpack.c.bf16 %v2436, %v2430
    %v2443 = vpack.c.bf16 %v2437, %v2431
    %v2444 = vpack.c.bf16 %v2438, %v2432
    %v2445 = vpack.c.bf16 %v2439, %v2433
    %v2446 = vpack.c.bf16 %v2440, %v2434
    %v2447 = vpack.c.bf16 %v2441, %v2435
    %v2454 = vunpack.c.l.b16 %v2442
    %v2455 = vunpack.c.l.b16 %v2443
    %v2456 = vunpack.c.l.b16 %v2444
    %v2457 = vunpack.c.l.b16 %v2445
    %v2458 = vunpack.c.l.b16 %v2446
    %v2459 = vunpack.c.l.b16 %v2447
    %v2460 = vunpack.c.h.b16 %v2442
    %v2461 = vunpack.c.h.b16 %v2443
    %v2462 = vunpack.c.h.b16 %v2444
    %v2463 = vunpack.c.h.b16 %v2445
    %v2464 = vunpack.c.h.b16 %v2446
    %v2465 = vunpack.c.h.b16 %v2447
    %v2466 = vpack.c.b16 %v2455, %v2454
    %v2467 = vpack.c.b16 %v2457, %v2456
    %v2468 = vpack.c.b16 %v2459, %v2458
    %v2469 = vpack.c.b16 %v2461, %v2460
    %v2470 = vpack.c.b16 %v2463, %v2462
    %v2471 = vpack.c.b16 %v2465, %v2464
    %2478 = vst [vmem:[#allocation14] sm:$0xff] %v2466
    %2479 = vst [vmem:[#allocation14 + $0x8] sm:$0xff] %v2467
    %2480 = vst [vmem:[#allocation14 + $0x10] sm:$0xff] %v2468
    %2481 = vst [vmem:[#allocation14 + $0x18] sm:$0xff] %v2469
    %2482 = vst [vmem:[#allocation14 + $0x20] sm:$0xff] %v2470
    %2483 = vst [vmem:[#allocation14 + $0x28] sm:$0xff] %v2471
    // Predicated region
    $region50: #{tpu_custom_call.1} parent=1 // pred_check
      _
    $region51: #{tpu_custom_call.1} parent=1 // pred_check_branch
      %2485 = sbr.rel (0) target = $region53
    $region52: #{tpu_custom_call.1} parent=1 // pred_region
      %s2487 = ssub.s32 384, 384
      %2488 = vsyncadd [#allocation4], %s2487
      %s2490 = sshll.u32 [#allocation13], 4
      %s2491 = int_to_ptr.vmem [resolvable:$true] %s2490
      %2493 = dma.vmem_to_hbm [thread:$0]  %s2491, 384, %s6, [#allocation4]
    $region53: #{tpu_custom_call.1} parent=1 // pred_fallthru
      _
    // Predicated region
    $region54: #{tpu_custom_call.1} parent=1 // pred_check
      _
    $region55: #{tpu_custom_call.1} parent=1 // pred_check_branch
      %2495 = sbr.rel (0) target = $region57
    $region56: #{tpu_custom_call.1} parent=1 // pred_region
      %s2497 = ssub.s32 768, 768
      %2498 = vsyncadd [#allocation15], %s2497
      %s2499 = sshll.u32 [#allocation14], 4
      %s2500 = int_to_ptr.vmem [resolvable:$true] %s2499
      %2505 = dma.vmem_to_hbm [thread:$0]  %s2500, 768, %s7, [#allocation15], 384, 384, 24
    $region57: #{tpu_custom_call.1} parent=1 // pred_fallthru
      _
    // Predicated region
    $region58: #{tpu_custom_call.1} parent=1 // pred_check
      _
    $region59: #{tpu_custom_call.1} parent=1 // pred_check_branch
      %2507 = sbr.rel (0) target = $region61
    $region60: #{tpu_custom_call.1} parent=1 // pred_region
      %2508 = dma.done [#allocation4], 384
    $region61: #{tpu_custom_call.1} parent=1 // pred_fallthru
      _
    // Predicated region
    $region62: #{tpu_custom_call.1} parent=1 // pred_check
      _
    $region63: #{tpu_custom_call.1} parent=1 // pred_check_branch
      %2510 = sbr.rel (0) target = $region65
    $region64: #{tpu_custom_call.1} parent=1 // pred_region
      %2511 = dma.done [#allocation15], 768
    $region65: #{tpu_custom_call.1} parent=1 // pred_fallthru
      _
    %2512 = vsyncpa [#allocation3], 1
    %2513 = vsyncpa [#allocation6], 1
    %2514 = vsyncpa [#allocation9], 1
    %2515 = vsyncpa [#allocation12], 1
    %2516 = vsyncpa [#allocation4], 1
    %2517 = vsyncpa [#allocation15], 1

</llo_original>
